<compile_context>
chip_gen: v7x
topology: tpu7x:2x2x1
jax: 0.10.0
libtpu: 0.0.40
codegen_flags: <defaults>
</compile_context>

<pallas_src>
import functools

import jax
import jax.numpy as jnp
from jax import lax
from jax.experimental import pallas as pl
from jax.experimental.pallas import tpu as pltpu


LANE = 128
MiB = 1024 * 1024


# ----------------------------------------------------------------------------
# small helpers
# ----------------------------------------------------------------------------
def _round_up(x, m):
    return (x + m - 1) // m * m


def _tpu_budget():
    """Returns (scoped-VMEM budget bytes, min grid steps for row-tiled kernels)."""
    phys = 0
    try:
        info = pltpu.get_tpu_info()
        phys = int(getattr(info, "vmem_capacity_bytes", 0) or 0)
    except Exception:
        phys = 0
    if phys <= 0:
        return 32 * MiB, 1          # unknown generation: conservative, runs everywhere
    if phys <= 64 * MiB:
        return 48 * MiB, 2          # v7x: 64 MiB physical VMEM, 2 TensorCores
    return 96 * MiB, 1              # v5e / v6e: 128 MiB physical VMEM, 1 TensorCore


def _choose_tm(m, row_bytes, fixed_bytes, *, budget, min_steps, cap=2048):
    """Largest row tile that fits ~half the VMEM budget (after weights), is a
    multiple of 8, and still yields >= min_steps grid steps when possible."""
    avail = max(budget // 2 - fixed_bytes, 4 * MiB)
    tm = avail // max(row_bytes, 1)
    tm = min(cap, tm, _round_up(m, 8))
    if min_steps > 1 and m > 8 * min_steps:
        tm = min(tm, _round_up(pl.cdiv(m, min_steps), 8))
    return max(8, (tm // 8) * 8)


def fold_bn(bnp, n_pad, eps=1e-5):
    """Eval-mode BN -> (scale, bias), lane-padded to n_pad.  scale is folded
    into the conv weights by the wrapper; kernels only add bias."""
    scale = bnp["gamma"] / jnp.sqrt(bnp["var"] + eps)
    bias = bnp["beta"] - bnp["mean"] * scale
    c = scale.shape[0]
    scale = jnp.pad(scale, (0, n_pad - c))
    bias = jnp.pad(bias, (0, n_pad - c))
    return scale.reshape(1, -1), bias.reshape(1, -1)


# ----------------------------------------------------------------------------
# Kernel 1: fused  (X @ W') + bias  [ReLU]   (1x1x1 conv with BN folded into W)
# ----------------------------------------------------------------------------
def _mm_bias_kernel(x_ref, w_ref, b_ref, o_ref, *, relu):
    acc = jnp.dot(x_ref[...], w_ref[...], preferred_element_type=jnp.float32)
    acc = acc + b_ref[...]
    if relu:
        acc = jnp.maximum(acc, 0.0)
    o_ref[...] = acc.astype(o_ref.dtype)


def matmul_bias_act(x, w, b, *, relu, out_dtype, budget, min_steps, tm_cap=2048):
    """x: (M, K), w: (K, N) lane-padded BN-folded weight, b: (1, N) f32 bias."""
    m, k = x.shape
    n = w.shape[1]
    dsz = jnp.dtype(x.dtype).itemsize
    osz = jnp.dtype(out_dtype).itemsize
    row_bytes = 2 * k * dsz + 2 * n * osz              # double-buffered in/out rows
    fixed_bytes = 2 * k * n * jnp.dtype(w.dtype).itemsize
    tm = _choose_tm(m, row_bytes, fixed_bytes, budget=budget,
                    min_steps=min_steps, cap=tm_cap)
    return pl.pallas_call(
        functools.partial(_mm_bias_kernel, relu=relu),
        out_shape=jax.ShapeDtypeStruct((m, n), out_dtype),
        grid_spec=pltpu.PrefetchScalarGridSpec(
            num_scalar_prefetch=0,
            grid=(pl.cdiv(m, tm),),
            in_specs=[
                pl.BlockSpec((tm, k), lambda i: (i, 0)),    # activation row tile
                pl.BlockSpec((k, n), lambda i: (0, 0)),     # weight (VMEM resident)
                pl.BlockSpec((1, n), lambda i: (0, 0)),     # bias
            ],
            out_specs=pl.BlockSpec((tm, n), lambda i: (i, 0)),
        ),
        compiler_params=pltpu.CompilerParams(
            dimension_semantics=("parallel",),
            vmem_limit_bytes=budget),
    )(x, w, b)


# ----------------------------------------------------------------------------
# conv2: 3x3 spatial taps over a width-padded, flattened activation
# ----------------------------------------------------------------------------
def _conv3x3_taps_epilogue(flat_frames, w_ref, b_ref, o_ref, *, H, W, Wp8, hs):
    """flat_frames: list of (R3, C1) values, R3=(H+3)*Wp8, zero-padded halo.
    Accumulates 9 taps per frame locally in f32, adds bias, ReLU, stores the
    valid (H, W) window of one frame into o_ref[0, 0]."""
    c2 = o_ref.shape[-1]
    bias = b_ref[...]                                  # (1, c2) f32
    for h0 in range(0, H, hs):                         # static H-chunk loop
        hh = min(hs, H - h0)
        mchunk = hh * Wp8
        r0 = h0 * Wp8
        acc = None
        for f_idx, xflat in enumerate(flat_frames):
            for kh in range(3):
                for kw in range(3):
                    start = r0 + kh * Wp8 + kw
                    tap = xflat[start:start + mchunk, :]    # contiguous row slice
                    p = jnp.dot(tap, w_ref[f_idx * 9 + kh * 3 + kw],
                                preferred_element_type=jnp.float32)
                    acc = p if acc is None else acc + p     # local f32 accumulation
        out = jnp.maximum(acc + bias, 0.0)
        out = out.reshape(hh, Wp8, c2)[:, :W, :]            # drop pad columns once
        o_ref[0, 0, h0:h0 + hh, :, :] = out.astype(o_ref.dtype)


def _conv12_center_kernel(x_ref, w1_ref, b1_ref, w2_ref, b2_ref, o_ref, pad_ref,
                          *, H, W, Wp8, hs):
    """Fused conv1(1x1x1)+bn1+relu -> spatially padded VMEM scratch ->
    conv2 (3x3, centre temporal slice of the inflated weight)+bn2+relu."""
    cin = x_ref.shape[-1]
    c1 = pad_ref.shape[-1]
    # conv1 for this frame (x block is already (1, 1, H*W, Cin))
    xf = x_ref[0, 0]
    y1 = jnp.dot(xf, w1_ref[...], preferred_element_type=jnp.float32)
    y1 = jnp.maximum(y1 + b1_ref[...], 0.0).astype(pad_ref.dtype)
    # build the zero halo in VMEM (no HBM round trip / jnp.pad copy of y1)
    pad_ref[...] = jnp.zeros_like(pad_ref)
    pad_ref[1:H + 1, 1:W + 1, :] = y1.reshape(H, W, c1)
    xflat = pad_ref[...].reshape((H + 3) * Wp8, c1)
    _conv3x3_taps_epilogue([xflat], w2_ref, b2_ref, o_ref,
                           H=H, W=W, Wp8=Wp8, hs=hs)


def conv12_center(x_vol, w1, b1, w2taps, b2, *, compute_dtype, budget,
                  rows_per_chunk=512):
    """x_vol: (nb, T, H*W, Cin) channels-last frames.  Returns (nb,T,H,W,C2)."""
    nb, t, hw, cin = x_vol.shape
    c1 = w1.shape[1]
    c2 = w2taps.shape[-1]
    # H, W recovered by the caller; passed via closure below
    raise_if = None  # placeholder (kept simple; H/W supplied by wrapper call)
    del raise_if
    return None  # never called directly; see _conv12_center_call


def _conv12_center_call(x_frames, w1, b1, w2taps, b2, *, H, W, compute_dtype,
                        budget, rows_per_chunk=512):
    nb, t, hw, cin = x_frames.shape
    c1 = w1.shape[1]
    c2 = w2taps.shape[-1]
    wp8 = _round_up(W + 2, 8)
    hp3 = H + 3
    hs = max(1, min(H, rows_per_chunk // wp8))
    kernel = functools.partial(_conv12_center_kernel, H=H, W=W, Wp8=wp8, hs=hs)
    return pl.pallas_call(
        kernel,
        out_shape=jax.ShapeDtypeStruct((nb, t, H, W, c2), compute_dtype),
        grid_spec=pltpu.PrefetchScalarGridSpec(
            num_scalar_prefetch=0,
            grid=(nb, t),
            in_specs=[
                pl.BlockSpec((1, 1, hw, cin), lambda n, tt: (n, tt, 0, 0)),
                pl.BlockSpec((cin, c1), lambda n, tt: (0, 0)),     # conv1 weight
                pl.BlockSpec((1, c1), lambda n, tt: (0, 0)),       # bn1 bias
                pl.BlockSpec((9, c1, c2), lambda n, tt: (0, 0, 0)),  # conv2 taps
                pl.BlockSpec((1, c2), lambda n, tt: (0, 0)),       # bn2 bias
            ],
            out_specs=pl.BlockSpec((1, 1, H, W, c2), lambda n, tt: (n, tt, 0, 0, 0)),
            scratch_shapes=[pltpu.VMEM((hp3, wp8, c1), compute_dtype)],
        ),
        compiler_params=pltpu.CompilerParams(
            dimension_semantics=("parallel", "parallel"),
            vmem_limit_bytes=budget),
    )(x_frames, w1, b1, w2taps, b2)


def _conv2_dense_kernel(xm_ref, x0_ref, xp_ref, w2_ref, b2_ref, o_ref,
                        *, H, W, Wp8, hs):
    """Dense 27-tap fallback (general 3x3x3 weights); frames t-1, t, t+1 are
    pre-padded by the wrapper."""
    c1 = xm_ref.shape[-1]
    r3 = (H + 3) * Wp8
    flats = [r[0, 0].reshape(r3, c1) for r in (xm_ref, x0_ref, xp_ref)]
    _conv3x3_taps_epilogue(flats, w2_ref, b2_ref, o_ref, H=H, W=W, Wp8=Wp8, hs=hs)


def conv2_dense(y1_vol, w2taps, b2, *, compute_dtype, budget, rows_per_chunk=512):
    nb, t, h, w, c1 = y1_vol.shape
    c2 = w2taps.shape[-1]
    wp8 = _round_up(w + 2, 8)
    hp3 = h + 3
    # temporal halo 1+1, spatial halo (1 top, 2 bottom, 1 left, lane-friendly right)
    # TODO(synk): the three overlapping frame specs below re-DMA 2/3 of the data;
    # a rolling 2-slot frame buffer would cut that (fallback path, low priority).
    yp = jnp.pad(y1_vol, ((0, 0), (1, 1), (1, 2), (1, wp8 - w - 1), (0, 0)))
    hs = max(1, min(h, rows_per_chunk // wp8))
    kernel = functools.partial(_conv2_dense_kernel, H=h, W=w, Wp8=wp8, hs=hs)
    blk = (1, 1, hp3, wp8, c1)
    return pl.pallas_call(
        kernel,
        out_shape=jax.ShapeDtypeStruct((nb, t, h, w, c2), compute_dtype),
        grid_spec=pltpu.PrefetchScalarGridSpec(
            num_scalar_prefetch=0,
            grid=(nb, t),
            in_specs=[
                pl.BlockSpec(blk, lambda n, tt: (n, tt, 0, 0, 0)),      # frame t-1
                pl.BlockSpec(blk, lambda n, tt: (n, tt + 1, 0, 0, 0)),  # frame t
                pl.BlockSpec(blk, lambda n, tt: (n, tt + 2, 0, 0, 0)),  # frame t+1
                pl.BlockSpec((27, c1, c2), lambda n, tt: (0, 0, 0)),
                pl.BlockSpec((1, c2), lambda n, tt: (0, 0)),
            ],
            out_specs=pl.BlockSpec((1, 1, h, w, c2), lambda n, tt: (n, tt, 0, 0, 0)),
        ),
        compiler_params=pltpu.CompilerParams(
            dimension_semantics=("parallel", "parallel"),
            vmem_limit_bytes=budget),
    )(yp, yp, yp, w2taps, b2)


# ----------------------------------------------------------------------------
# Kernel 3: conv3 + bn3  fused with  downsample + bn  + residual add + ReLU
# ----------------------------------------------------------------------------
def _conv3_ds_kernel(y_ref, w3_ref, x_ref, wd_ref, b_ref, o_ref):
    acc = jnp.dot(y_ref[...], w3_ref[...], preferred_element_type=jnp.float32)
    acc = acc + jnp.dot(x_ref[...], wd_ref[...], preferred_element_type=jnp.float32)
    o_ref[...] = jnp.maximum(acc + b_ref[...], 0.0).astype(o_ref.dtype)


def conv3_downsample_fused(y2, w3, x, wd, bias, *, out_dtype, budget, min_steps,
                           tm_cap=2048):
    m, k1 = y2.shape
    k2 = x.shape[1]
    n = w3.shape[1]
    dsz = jnp.dtype(y2.dtype).itemsize
    osz = jnp.dtype(out_dtype).itemsize
    row_bytes = 2 * (k1 + k2) * dsz + 2 * n * osz
    fixed_bytes = 2 * (k1 + k2) * n * jnp.dtype(w3.dtype).itemsize
    tm = _choose_tm(m, row_bytes, fixed_bytes, budget=budget,
                    min_steps=min_steps, cap=tm_cap)
    return pl.pallas_call(
        _conv3_ds_kernel,
        out_shape=jax.ShapeDtypeStruct((m, n), out_dtype),
        grid_spec=pltpu.PrefetchScalarGridSpec(
            num_scalar_prefetch=0,
            grid=(pl.cdiv(m, tm),),
            in_specs=[
                pl.BlockSpec((tm, k1), lambda i: (i, 0)),  # y2 tile
                pl.BlockSpec((k1, n), lambda i: (0, 0)),   # w3 (BN folded)
                pl.BlockSpec((tm, k2), lambda i: (i, 0)),  # x tile (downsample input)
                pl.BlockSpec((k2, n), lambda i: (0, 0)),   # wd (BN folded)
                pl.BlockSpec((1, n), lambda i: (0, 0)),    # combined bias b3+bd
            ],
            out_specs=pl.BlockSpec((tm, n), lambda i: (i, 0)),
        ),
        compiler_params=pltpu.CompilerParams(
            dimension_semantics=("parallel",),
            vmem_limit_bytes=budget),
    )(y2, w3, x, wd, bias)


# ----------------------------------------------------------------------------
# Parameter construction (deterministic, "inflated" from synthetic 2D weights)
# ----------------------------------------------------------------------------
def make_params(key, inplanes, planes, expansion=4):
    outplanes = planes * expansion
    ks = jax.random.split(key, 8)

    def rnd(k, shape, scale=0.1):
        return scale * jax.random.normal(k, shape, dtype=jnp.float32)

    def bn(k, c):
        k1, k2, k3, k4 = jax.random.split(k, 4)
        gamma = 1.0 + 0.1 * jax.random.normal(k1, (c,), jnp.float32)
        beta = 0.1 * jax.random.normal(k2, (c,), jnp.float32)
        mean = 0.1 * jax.random.normal(k3, (c,), jnp.float32)
        var = jnp.abs(jax.random.normal(k4, (c,), jnp.float32)) + 0.5
        return dict(gamma=gamma, beta=beta, mean=mean, var=var)

    w1 = rnd(ks[0], (planes, inplanes, 1, 1, 1))                       # time_dim=1
    w2_2d = rnd(ks[1], (planes, planes, 3, 3))                         # inflate center
    w2 = jnp.zeros((planes, planes, 3, 3, 3), jnp.float32).at[:, :, 1, :, :].set(w2_2d)
    w3 = rnd(ks[2], (outplanes, planes, 1, 1, 1))
    wd = rnd(ks[3], (outplanes, inplanes, 1, 1, 1))
    return dict(
        w1=w1, bn1=bn(ks[4], planes),
        w2=w2, bn2=bn(ks[5], planes),
        w3=w3, bn3=bn(ks[6], outplanes),
        wd=wd, bnd=bn(ks[7], outplanes),
    )


# ----------------------------------------------------------------------------
# Bottleneck3d forward (Pallas hot path)
# ----------------------------------------------------------------------------
def bottleneck3d_forward(x_ncdhw, params, *, center_only=True,
                         compute_dtype=jnp.bfloat16, out_dtype=None,
                         rows_per_chunk=512):
    """Eval-mode Bottleneck3d forward with BN folded into the conv weights.

    center_only:   host bool (NO device introspection -> jit-safe). True matches
                   inflate_conv(center=True) weights (temporal taps 0/2 are zero).
    compute_dtype: dtype of MXU inputs / stored intermediates (epilogue math f32).
    out_dtype:     dtype of the block output (default: compute_dtype).
    """
    if out_dtype is None:
        out_dtype = compute_dtype
    budget, min_steps = _tpu_budget()

    nb, cin, t, h, w = x_ncdhw.shape
    planes = params["w1"].shape[0]
    outplanes = params["w3"].shape[0]
    pp = _round_up(planes, LANE)       # lane-dense intermediate channel width
    op = _round_up(outplanes, LANE)    # lane-dense output channel width

    x_nthwc = jnp.transpose(x_ncdhw, (0, 2, 3, 4, 1)).astype(compute_dtype)
    m = nb * t * h * w
    x_flat = x_nthwc.reshape(m, cin)                    # free metadata reshape
    x_frames = x_nthwc.reshape(nb, t, h * w, cin)       # free metadata reshape

    # --- conv1 weights (BN scale folded into columns) ------------------------
    s1, b1 = fold_bn(params["bn1"], pp)
    w1 = params["w1"].reshape(planes, cin).T
    w1 = (jnp.pad(w1, ((0, 0), (0, pp - planes))) * s1).astype(compute_dtype)

    # --- conv2 weights + kernel ----------------------------------------------
    s2, b2 = fold_bn(params["bn2"], pp)
    if center_only:
        # (Cout, Cin, kh, kw) -> (kh, kw, Cin, Cout) -> (9, Cin, Cout), lane padded
        w2c = jnp.transpose(params["w2"][:, :, 1], (2, 3, 1, 0)).reshape(9, planes, planes)
        w2c = jnp.pad(w2c, ((0, 0), (0, pp - planes), (0, pp - planes)))
        w2c = (w2c * s2[None]).astype(compute_dtype)
        y2 = _conv12_center_call(x_frames, w1, b1, w2c, b2, H=h, W=w,
                                 compute_dtype=compute_dtype, budget=budget,
                                 rows_per_chunk=rows_per_chunk)
    else:
        y1 = matmul_bias_act(x_flat, w1, b1, relu=True, out_dtype=compute_dtype,
                             budget=budget, min_steps=min_steps)
        w2d = jnp.transpose(params["w2"], (2, 3, 4, 1, 0)).reshape(27, planes, planes)
        w2d = jnp.pad(w2d, ((0, 0), (0, pp - planes), (0, pp - planes)))
        w2d = (w2d * s2[None]).astype(compute_dtype)
        y2 = conv2_dense(y1.reshape(nb, t, h, w, pp), w2d, b2,
                         compute_dtype=compute_dtype, budget=budget,
                         rows_per_chunk=rows_per_chunk)
    y2_flat = y2.reshape(m, pp)                          # free metadata reshape

    # --- conv3 + bn3 fused with downsample + bn + add + relu -----------------
    s3, b3 = fold_bn(params["bn3"], op)
    w3 = params["w3"].reshape(outplanes, planes).T
    w3 = (jnp.pad(w3, ((0, pp - planes), (0, op - outplanes))) * s3).astype(compute_dtype)
    sd, bd = fold_bn(params["bnd"], op)
    wd = params["wd"].reshape(outplanes, cin).T
    wd = (jnp.pad(wd, ((0, 0), (0, op - outplanes))) * sd).astype(compute_dtype)
    bias = b3 + bd                                       # single combined bias

    out = conv3_downsample_fused(y2_flat, w3, x_flat, wd, bias,
                                 out_dtype=out_dtype, budget=budget,
                                 min_steps=min_steps)
    out = out[:, :outplanes].reshape(nb, t, h, w, outplanes)
    return jnp.transpose(out, (0, 4, 1, 2, 3))           # back to NCDHW


# ----------------------------------------------------------------------------
# Pure-JAX reference (eval-mode BN) for correctness checks
# ----------------------------------------------------------------------------
def reference_forward(x, params, eps=1e-5):
    dn = ("NCDHW", "OIDHW", "NCDHW")

    def conv(inp, w, pad):
        return lax.conv_general_dilated(
            inp, w, window_strides=(1, 1, 1),
            padding=[(pad, pad)] * 3, dimension_numbers=dn)

    def bn(inp, p):
        sh = (1, -1, 1, 1, 1)
        return (inp - p["mean"].reshape(sh)) / jnp.sqrt(p["var"].reshape(sh) + eps) \
            * p["gamma"].reshape(sh) + p["beta"].reshape(sh)

    out = jax.nn.relu(bn(conv(x, params["w1"], 0), params["bn1"]))
    out = jax.nn.relu(bn(conv(out, params["w2"], 1), params["bn2"]))
    out = bn(conv(out, params["w3"], 0), params["bn3"])
    residual = bn(conv(x, params["wd"], 0), params["bnd"])
    return jax.nn.relu(out + residual)


if __name__ == "__main__":
    key = jax.random.PRNGKey(0)
    k_x, k_p, k_d = jax.random.split(key, 3)

    # Small shapes: batch=2, inplanes=16, planes=8 (outplanes=32), T=4, H=W=8.
    Nb, Cin, T, H, W = 2, 16, 4, 8, 8
    planes = 8
    x = jax.random.normal(k_x, (Nb, Cin, T, H, W), dtype=jnp.float32)
    params = make_params(k_p, inplanes=Cin, planes=planes)

    ref = jax.block_until_ready(reference_forward(x, params))

    # f32 path (inflated / centre-only conv2) - tight tolerance.
    out_f32 = jax.block_until_ready(
        bottleneck3d_forward(x, params, center_only=True, compute_dtype=jnp.float32))
    assert out_f32.shape == (Nb, planes * 4, T, H, W), out_f32.shape
    assert jnp.allclose(out_f32, ref, rtol=1e-3, atol=1e-3), \
        float(jnp.max(jnp.abs(out_f32 - ref)))

    # Optimized path (bf16 MXU inputs, bf16 writeback, f32 epilogue math).
    out_bf16 = jax.block_until_ready(
        bottleneck3d_forward(x, params, center_only=True, compute_dtype=jnp.bfloat16))
    assert out_bf16.shape == (Nb, planes * 4, T, H, W), out_bf16.shape
    assert jnp.allclose(out_bf16.astype(jnp.float32), ref, rtol=5e-2, atol=5e-2), \
        float(jnp.max(jnp.abs(out_bf16.astype(jnp.float32) - ref)))

    # Dense 27-tap fallback (general, non-inflated 3x3x3 weights).
    params_d = dict(params)
    params_d["w2"] = params["w2"] + 0.05 * jax.random.normal(
        k_d, params["w2"].shape, dtype=jnp.float32)
    ref_d = jax.block_until_ready(reference_forward(x, params_d))
    out_d = jax.block_until_ready(
        bottleneck3d_forward(x, params_d, center_only=False,
                             compute_dtype=jnp.float32))
    assert jnp.allclose(out_d, ref_d, rtol=1e-3, atol=1e-3), \
        float(jnp.max(jnp.abs(out_d - ref_d)))

    print("KERNEL_OK")
</pallas_src>

<mosaic_0001>
module attributes {stable_mosaic.version = 11 : i64} {
  func.func @_conv12_center_kernel(%arg0: i32, %arg1: i32, %arg2: memref<1x1x64x16xf32, #tpu.memory_space<vmem>>, %arg3: memref<16x128xf32, #tpu.memory_space<vmem>>, %arg4: memref<1x128xf32, #tpu.memory_space<vmem>>, %arg5: memref<9x128x128xf32, #tpu.memory_space<vmem>>, %arg6: memref<1x128xf32, #tpu.memory_space<vmem>>, %arg7: memref<1x1x8x8x128xf32, #tpu.memory_space<vmem>>, %arg8: memref<11x16x128xf32, #tpu.memory_space<vmem>>) attributes {dimension_semantics = [#tpu.dimension_semantics<parallel>, #tpu.dimension_semantics<parallel>], iteration_bounds = array<i64: 2, 4>, scalar_prefetch = 0 : i64, scratch_operands = 1 : i64, tpu.core_type = #tpu.core_type<tc>, window_params = [{transform_indices = @transform_0, window_bounds = array<i64: 1, 1, 64, 16>}, {pipeline_mode = #tpu.pipeline_mode<synchronous>, transform_indices = @transform_1, window_bounds = array<i64: 16, 128>}, {pipeline_mode = #tpu.pipeline_mode<synchronous>, transform_indices = @transform_2, window_bounds = array<i64: 1, 128>}, {pipeline_mode = #tpu.pipeline_mode<synchronous>, transform_indices = @transform_3, window_bounds = array<i64: 9, 128, 128>}, {pipeline_mode = #tpu.pipeline_mode<synchronous>, transform_indices = @transform_4, window_bounds = array<i64: 1, 128>}, {transform_indices = @transform_5, window_bounds = array<i64: 1, 1, 8, 8, 128>}]} {
    %c0 = arith.constant 0 : index
    %c0_0 = arith.constant 0 : index
    %c0_1 = arith.constant 0 : index
    %c0_2 = arith.constant 0 : index
    %0 = vector.load %arg2[%c0, %c0_0, %c0_1, %c0_2] : memref<1x1x64x16xf32, #tpu.memory_space<vmem>>, vector<1x1x64x16xf32>
    %1 = vector.shape_cast %0 : vector<1x1x64x16xf32> to vector<64x16xf32>
    %c0_3 = arith.constant 0 : index
    %c0_4 = arith.constant 0 : index
    %2 = vector.load %arg3[%c0_3, %c0_4] : memref<16x128xf32, #tpu.memory_space<vmem>>, vector<16x128xf32>
    %cst = arith.constant dense<0.000000e+00> : vector<64x128xf32>
    %3 = tpu.matmul %1, %2, %cst {dimension_numbers = #tpu.dot_dimension_numbers<[1], [0], [0], [1], [0, 0, 1, 1], [], []>} : vector<64x16xf32>, vector<16x128xf32>, vector<64x128xf32> -> vector<64x128xf32>
    %c0_5 = arith.constant 0 : index
    %c0_6 = arith.constant 0 : index
    %4 = vector.load %arg4[%c0_5, %c0_6] : memref<1x128xf32, #tpu.memory_space<vmem>>, vector<1x128xf32>
    %5 = vector.broadcast %4 : vector<1x128xf32> to vector<64x128xf32>
    %6 = arith.addf %3, %5 : vector<64x128xf32>
    %cst_7 = arith.constant 0.000000e+00 : f32
    %7 = vector.broadcast %cst_7 : f32 to vector<64x128xf32>
    %8 = arith.maximumf %6, %7 : vector<64x128xf32>
    %cst_8 = arith.constant 0.000000e+00 : f32
    %9 = vector.broadcast %cst_8 : f32 to vector<11x16x128xf32>
    %c0_9 = arith.constant 0 : index
    %c0_10 = arith.constant 0 : index
    %c0_11 = arith.constant 0 : index
    %10 = vector.load %arg8[%c0_9, %c0_10, %c0_11] : memref<11x16x128xf32, #tpu.memory_space<vmem>>, vector<11x16x128xf32>
    tpu.vector_store %arg8[%c0_9, %c0_10, %c0_11], %9 {strides = array<i32>} : memref<11x16x128xf32, #tpu.memory_space<vmem>>, vector<11x16x128xf32>,
    %11 = vector.shape_cast %8 : vector<64x128xf32> to vector<8x8x128xf32>
    %c1 = arith.constant 1 : index
    %c1_12 = arith.constant 1 : index
    %c0_13 = arith.constant 0 : index
    %12 = vector.load %arg8[%c1, %c1_12, %c0_13] : memref<11x16x128xf32, #tpu.memory_space<vmem>>, vector<8x8x128xf32>
    tpu.vector_store %arg8[%c1, %c1_12, %c0_13], %11 {strides = array<i32>} : memref<11x16x128xf32, #tpu.memory_space<vmem>>, vector<8x8x128xf32>,
    %c0_14 = arith.constant 0 : index
    %c0_15 = arith.constant 0 : index
    %c0_16 = arith.constant 0 : index
    %13 = vector.load %arg8[%c0_14, %c0_15, %c0_16] : memref<11x16x128xf32, #tpu.memory_space<vmem>>, vector<11x16x128xf32>
    %14 = vector.shape_cast %13 : vector<11x16x128xf32> to vector<176x128xf32>
    %c0_17 = arith.constant 0 : index
    %c0_18 = arith.constant 0 : index
    %15 = vector.load %arg6[%c0_17, %c0_18] : memref<1x128xf32, #tpu.memory_space<vmem>>, vector<1x128xf32>
    %16 = vector.extract_strided_slice %14 {offsets = [0, 0], sizes = [128, 128], strides = [1, 1]} : vector<176x128xf32> to vector<128x128xf32>
    %c0_19 = arith.constant 0 : index
    %c0_20 = arith.constant 0 : index
    %c0_21 = arith.constant 0 : index
    %17 = vector.load %arg5[%c0_19, %c0_20, %c0_21] : memref<9x128x128xf32, #tpu.memory_space<vmem>>, vector<1x128x128xf32>
    %18 = vector.shape_cast %17 : vector<1x128x128xf32> to vector<128x128xf32>
    %cst_22 = arith.constant dense<0.000000e+00> : vector<128x128xf32>
    %19 = tpu.matmul %16, %18, %cst_22 {dimension_numbers = #tpu.dot_dimension_numbers<[1], [0], [0], [1], [0, 0, 1, 1], [], []>} : vector<128x128xf32>, vector<128x128xf32>, vector<128x128xf32> -> vector<128x128xf32>
    %20 = vector.extract_strided_slice %14 {offsets = [1, 0], sizes = [128, 128], strides = [1, 1]} : vector<176x128xf32> to vector<128x128xf32>
    %c1_23 = arith.constant 1 : index
    %c0_24 = arith.constant 0 : index
    %c0_25 = arith.constant 0 : index
    %21 = vector.load %arg5[%c1_23, %c0_24, %c0_25] : memref<9x128x128xf32, #tpu.memory_space<vmem>>, vector<1x128x128xf32>
    %22 = vector.shape_cast %21 : vector<1x128x128xf32> to vector<128x128xf32>
    %cst_26 = arith.constant dense<0.000000e+00> : vector<128x128xf32>
    %23 = tpu.matmul %20, %22, %cst_26 {dimension_numbers = #tpu.dot_dimension_numbers<[1], [0], [0], [1], [0, 0, 1, 1], [], []>} : vector<128x128xf32>, vector<128x128xf32>, vector<128x128xf32> -> vector<128x128xf32>
    %24 = arith.addf %19, %23 : vector<128x128xf32>
    %25 = vector.extract_strided_slice %14 {offsets = [2, 0], sizes = [128, 128], strides = [1, 1]} : vector<176x128xf32> to vector<128x128xf32>
    %c2 = arith.constant 2 : index
    %c0_27 = arith.constant 0 : index
    %c0_28 = arith.constant 0 : index
    %26 = vector.load %arg5[%c2, %c0_27, %c0_28] : memref<9x128x128xf32, #tpu.memory_space<vmem>>, vector<1x128x128xf32>
    %27 = vector.shape_cast %26 : vector<1x128x128xf32> to vector<128x128xf32>
    %cst_29 = arith.constant dense<0.000000e+00> : vector<128x128xf32>
    %28 = tpu.matmul %25, %27, %cst_29 {dimension_numbers = #tpu.dot_dimension_numbers<[1], [0], [0], [1], [0, 0, 1, 1], [], []>} : vector<128x128xf32>, vector<128x128xf32>, vector<128x128xf32> -> vector<128x128xf32>
    %29 = arith.addf %24, %28 : vector<128x128xf32>
    %30 = vector.extract_strided_slice %14 {offsets = [16, 0], sizes = [128, 128], strides = [1, 1]} : vector<176x128xf32> to vector<128x128xf32>
    %c3 = arith.constant 3 : index
    %c0_30 = arith.constant 0 : index
    %c0_31 = arith.constant 0 : index
    %31 = vector.load %arg5[%c3, %c0_30, %c0_31] : memref<9x128x128xf32, #tpu.memory_space<vmem>>, vector<1x128x128xf32>
    %32 = vector.shape_cast %31 : vector<1x128x128xf32> to vector<128x128xf32>
    %cst_32 = arith.constant dense<0.000000e+00> : vector<128x128xf32>
    %33 = tpu.matmul %30, %32, %cst_32 {dimension_numbers = #tpu.dot_dimension_numbers<[1], [0], [0], [1], [0, 0, 1, 1], [], []>} : vector<128x128xf32>, vector<128x128xf32>, vector<128x128xf32> -> vector<128x128xf32>
    %34 = arith.addf %29, %33 : vector<128x128xf32>
    %35 = vector.extract_strided_slice %14 {offsets = [17, 0], sizes = [128, 128], strides = [1, 1]} : vector<176x128xf32> to vector<128x128xf32>
    %c4 = arith.constant 4 : index
    %c0_33 = arith.constant 0 : index
    %c0_34 = arith.constant 0 : index
    %36 = vector.load %arg5[%c4, %c0_33, %c0_34] : memref<9x128x128xf32, #tpu.memory_space<vmem>>, vector<1x128x128xf32>
    %37 = vector.shape_cast %36 : vector<1x128x128xf32> to vector<128x128xf32>
    %cst_35 = arith.constant dense<0.000000e+00> : vector<128x128xf32>
    %38 = tpu.matmul %35, %37, %cst_35 {dimension_numbers = #tpu.dot_dimension_numbers<[1], [0], [0], [1], [0, 0, 1, 1], [], []>} : vector<128x128xf32>, vector<128x128xf32>, vector<128x128xf32> -> vector<128x128xf32>
    %39 = arith.addf %34, %38 : vector<128x128xf32>
    %40 = vector.extract_strided_slice %14 {offsets = [18, 0], sizes = [128, 128], strides = [1, 1]} : vector<176x128xf32> to vector<128x128xf32>
    %c5 = arith.constant 5 : index
    %c0_36 = arith.constant 0 : index
    %c0_37 = arith.constant 0 : index
    %41 = vector.load %arg5[%c5, %c0_36, %c0_37] : memref<9x128x128xf32, #tpu.memory_space<vmem>>, vector<1x128x128xf32>
    %42 = vector.shape_cast %41 : vector<1x128x128xf32> to vector<128x128xf32>
    %cst_38 = arith.constant dense<0.000000e+00> : vector<128x128xf32>
    %43 = tpu.matmul %40, %42, %cst_38 {dimension_numbers = #tpu.dot_dimension_numbers<[1], [0], [0], [1], [0, 0, 1, 1], [], []>} : vector<128x128xf32>, vector<128x128xf32>, vector<128x128xf32> -> vector<128x128xf32>
    %44 = arith.addf %39, %43 : vector<128x128xf32>
    %45 = vector.extract_strided_slice %14 {offsets = [32, 0], sizes = [128, 128], strides = [1, 1]} : vector<176x128xf32> to vector<128x128xf32>
    %c6 = arith.constant 6 : index
    %c0_39 = arith.constant 0 : index
    %c0_40 = arith.constant 0 : index
    %46 = vector.load %arg5[%c6, %c0_39, %c0_40] : memref<9x128x128xf32, #tpu.memory_space<vmem>>, vector<1x128x128xf32>
    %47 = vector.shape_cast %46 : vector<1x128x128xf32> to vector<128x128xf32>
    %cst_41 = arith.constant dense<0.000000e+00> : vector<128x128xf32>
    %48 = tpu.matmul %45, %47, %cst_41 {dimension_numbers = #tpu.dot_dimension_numbers<[1], [0], [0], [1], [0, 0, 1, 1], [], []>} : vector<128x128xf32>, vector<128x128xf32>, vector<128x128xf32> -> vector<128x128xf32>
    %49 = arith.addf %44, %48 : vector<128x128xf32>
    %50 = vector.extract_strided_slice %14 {offsets = [33, 0], sizes = [128, 128], strides = [1, 1]} : vector<176x128xf32> to vector<128x128xf32>
    %c7 = arith.constant 7 : index
    %c0_42 = arith.constant 0 : index
    %c0_43 = arith.constant 0 : index
    %51 = vector.load %arg5[%c7, %c0_42, %c0_43] : memref<9x128x128xf32, #tpu.memory_space<vmem>>, vector<1x128x128xf32>
    %52 = vector.shape_cast %51 : vector<1x128x128xf32> to vector<128x128xf32>
    %cst_44 = arith.constant dense<0.000000e+00> : vector<128x128xf32>
    %53 = tpu.matmul %50, %52, %cst_44 {dimension_numbers = #tpu.dot_dimension_numbers<[1], [0], [0], [1], [0, 0, 1, 1], [], []>} : vector<128x128xf32>, vector<128x128xf32>, vector<128x128xf32> -> vector<128x128xf32>
    %54 = arith.addf %49, %53 : vector<128x128xf32>
    %55 = vector.extract_strided_slice %14 {offsets = [34, 0], sizes = [128, 128], strides = [1, 1]} : vector<176x128xf32> to vector<128x128xf32>
    %c8 = arith.constant 8 : index
    %c0_45 = arith.constant 0 : index
    %c0_46 = arith.constant 0 : index
    %56 = vector.load %arg5[%c8, %c0_45, %c0_46] : memref<9x128x128xf32, #tpu.memory_space<vmem>>, vector<1x128x128xf32>
    %57 = vector.shape_cast %56 : vector<1x128x128xf32> to vector<128x128xf32>
    %cst_47 = arith.constant dense<0.000000e+00> : vector<128x128xf32>
    %58 = tpu.matmul %55, %57, %cst_47 {dimension_numbers = #tpu.dot_dimension_numbers<[1], [0], [0], [1], [0, 0, 1, 1], [], []>} : vector<128x128xf32>, vector<128x128xf32>, vector<128x128xf32> -> vector<128x128xf32>
    %59 = arith.addf %54, %58 : vector<128x128xf32>
    %60 = vector.broadcast %15 : vector<1x128xf32> to vector<128x128xf32>
    %61 = arith.addf %59, %60 : vector<128x128xf32>
    %cst_48 = arith.constant 0.000000e+00 : f32
    %62 = vector.broadcast %cst_48 : f32 to vector<128x128xf32>
    %63 = arith.maximumf %61, %62 : vector<128x128xf32>
    %64 = vector.shape_cast %63 : vector<128x128xf32> to vector<8x16x128xf32>
    %65 = vector.extract_strided_slice %64 {offsets = [0, 0, 0], sizes = [8, 8, 128], strides = [1, 1, 1]} : vector<8x16x128xf32> to vector<8x8x128xf32>
    %c0_49 = arith.constant 0 : index
    %c0_50 = arith.constant 0 : index
    %c0_51 = arith.constant 0 : index
    %c0_52 = arith.constant 0 : index
    %c0_53 = arith.constant 0 : index
    %66 = vector.load %arg7[%c0_49, %c0_50, %c0_51, %c0_52, %c0_53] : memref<1x1x8x8x128xf32, #tpu.memory_space<vmem>>, vector<1x1x8x8x128xf32>
    %67 = vector.shape_cast %66 : vector<1x1x8x8x128xf32> to vector<8x8x128xf32>
    %68 = vector.shape_cast %65 : vector<8x8x128xf32> to vector<1x1x8x8x128xf32>
    tpu.vector_store %arg7[%c0_49, %c0_50, %c0_51, %c0_52, %c0_53], %68 {strides = array<i32>} : memref<1x1x8x8x128xf32, #tpu.memory_space<vmem>>, vector<1x1x8x8x128xf32>,
    return
  }
  func.func @transform_0(%arg0: i32, %arg1: i32) -> (i32, i32, i32, i32) {
    %c0_i32 = arith.constant 0 : i32
    %c0_i32_0 = arith.constant 0 : i32
    %c0_i32_1 = arith.constant 0 : i32
    return %arg0, %arg1, %c0_i32, %c0_i32_0 : i32, i32, i32, i32
  }
  func.func @transform_1(%arg0: i32, %arg1: i32) -> (i32, i32) {
    %c0_i32 = arith.constant 0 : i32
    %c0_i32_0 = arith.constant 0 : i32
    %c0_i32_1 = arith.constant 0 : i32
    return %c0_i32, %c0_i32_0 : i32, i32
  }
  func.func @transform_2(%arg0: i32, %arg1: i32) -> (i32, i32) {
    %c0_i32 = arith.constant 0 : i32
    %c0_i32_0 = arith.constant 0 : i32
    %c0_i32_1 = arith.constant 0 : i32
    return %c0_i32, %c0_i32_0 : i32, i32
  }
  func.func @transform_3(%arg0: i32, %arg1: i32) -> (i32, i32, i32) {
    %c0_i32 = arith.constant 0 : i32
    %c0_i32_0 = arith.constant 0 : i32
    %c0_i32_1 = arith.constant 0 : i32
    %c0_i32_2 = arith.constant 0 : i32
    return %c0_i32, %c0_i32_0, %c0_i32_1 : i32, i32, i32
  }
  func.func @transform_4(%arg0: i32, %arg1: i32) -> (i32, i32) {
    %c0_i32 = arith.constant 0 : i32
    %c0_i32_0 = arith.constant 0 : i32
    %c0_i32_1 = arith.constant 0 : i32
    return %c0_i32, %c0_i32_0 : i32, i32
  }
  func.func @transform_5(%arg0: i32, %arg1: i32) -> (i32, i32, i32, i32, i32) {
    %c0_i32 = arith.constant 0 : i32
    %c0_i32_0 = arith.constant 0 : i32
    %c0_i32_1 = arith.constant 0 : i32
    %c0_i32_2 = arith.constant 0 : i32
    return %arg0, %arg1, %c0_i32, %c0_i32_0, %c0_i32_1 : i32, i32, i32, i32, i32
  }
}

</mosaic_0001>

<llo_original>
// kernel: tpu_custom_call.1
$region0: #{tpu_custom_call.1}
  #allocation0 [shape = 'u32[]', space=smem, size = 0x4, offset = 0x4, fixed_abs, tag = 'smem constant byte address 0x4 - core index']
  #allocation1 [shape = 'u32[144,128]{1,0:T(1,128)}', space=vmem, size = 0x12000, scoped, tag = 'internal scratch']
  #allocation2 [shape = 'f32[11,16,128]{2,1,0:T(8,128)}', space=vmem, size = 0x16000, scoped, tag = 'scratch operand']
  %s0 = inlined_call_operand.vmem [shape: f32[2,4,64,16], index: 0, kind: input, shape index: {}]
  %s1 = inlined_call_operand.vmem [shape: f32[16,128], index: 1, kind: input, shape index: {}]
  %s2 = inlined_call_operand.vmem [shape: f32[1,128], index: 2, kind: input, shape index: {}]
  %s3 = inlined_call_operand.hbm [shape: f32[9,128,128], index: 3, kind: input, shape index: {}]
  %s4 = inlined_call_operand.vmem [shape: f32[1,128], index: 4, kind: input, shape index: {}]
  %s5 = inlined_call_operand.hbm [shape: f32[2,4,8,8,128], index: 5, kind: output, shape index: {}]
  %s6 = sld [smem:[#allocation0]]
  $region57: #{tpu_custom_call.1} parent=0
    _
  %s8 = ssub.s32 1, %s6
  %s9 = scalar_select 0, %s8, %s6
  $region1: #{tpu_custom_call.1} parent=0
    #allocation3 [shape = 'u8[589824]{0}', space=vmem, size = 0x90000, scoped, tag = 'input window, operand 3, single buffered']
    #allocation4 [shape = 's32[2]{0}', space=sflag, size = 0x8, scoped, tag = 'scoped memory for tpu_custom_call.1']
    #allocation5 [shape = 's32[2]{0}', space=sflag, size = 0x8, scoped, tag = 'scoped memory for tpu_custom_call.1']
    #allocation6 [shape = 'u8[65536]{0}', space=vmem, size = 0x10000, scoped, tag = 'output window, operand 0']
    %10 = vsyncpa [#allocation4], 0
    %11 = vsyncpa [#allocation5], 0
    %s12 = scalar_lea.sflag [#allocation5], 1
    %13 = vsyncpa %s12, 0
    loop: start=0, step=1, limit=10
    $region2: #{tpu_custom_call.1} parent=1 // loop_pre_header
      _
    $region3: #{tpu_custom_call.1} parent=1 // loop_header
      %s15 = sphi 0, %s19
      %p16 = scmp.ge.s32.totalorder %s15, 10
      %s22 = sphi 0, %s34
      %s23 = sphi 0, %s30
      %s24 = sphi 0, %s22
      %s25 = sphi 0, %s23
      %s26 = sphi 0, %s24
      %s27 = sphi 0, %s25
      %s39 = sphi 0, %s41
      %s42 = sphi 0, %s39
      %s43 = sphi 0, %s42
      %s59 = sphi 0, %s43
      %s63 = sphi 0, %s63
      %s65 = sphi 0, %s63
      %s66 = sphi 0, %s65
      %s80 = sphi 0, %s66
      %s84 = sphi 0, %s84
      %s86 = sphi 0, %s84
      %s87 = sphi 0, %s86
      %s101 = sphi 0, %s87
      %s105 = sphi 0, %s105
      %s107 = sphi 0, %s105
      %s108 = sphi 0, %s107
      %s122 = sphi 0, %s108
      %s126 = sphi 0, %s126
      %s128 = sphi 0, %s126
      %s129 = sphi 0, %s128
      %s143 = sphi 0, %s129
      %s151 = sphi 0, %s153
      %s154 = sphi 0, %s151
      %s155 = sphi 0, %s154
      %s171 = sphi 0, %s155
    $region4: #{tpu_custom_call.1} parent=1 // loop_header_branch
      %18 = sbr.rel (%p16) target = $region8
    $region5: #{tpu_custom_call.1} parent=1 // loop_body
      %s20 = ssub.s32 %s15, 1
      %s21 = ssub.s32 %s15, 2
      %s28 = sadd.s32 1, %s23
      %p29 = scmp.ge.s32.totalorder %s28, 4
      %s30 = scalar_select %p29, 0, %s28
      %s31 = sadd.s32 1, %s22
      %s32 = scalar_select %p29, %s31, %s22
      %p33 = scmp.ge.s32.totalorder %s32, 2
      %s34 = scalar_select %p33, 0, %s32
      %s35 = ssub.s32 %s22, %s34
      %s36 = ssub.s32 %s23, %s30
      %s37 = sor.u32 %s35, %s36
      %p38 = scmp.eq.s32.totalorder %s37, 0
      %s40 = sadd.s32 %s39, 1
      %s41 = scalar_select %p38, %s39, %s40
      %p44 = pneg %p38
      %p45 = scmp.eq.s32.totalorder %s15, 7
      %p46 = por %p44, %p45
      %p47 = scmp.ne.s32.totalorder %s39, %s42
      %p48 = scmp.eq.s32.totalorder %s15, 0
      %p49 = por %p47, %p48
      %p50 = scmp.ne.s32.totalorder %s39, %s42
      %p51 = scmp.eq.s32.totalorder %s20, 7
      %p52 = por %p50, %p51
      %p53 = scmp.ne.s32.totalorder %s42, %s43
      %p54 = scmp.eq.s32.totalorder %s20, 0
      %p55 = por %p53, %p54
      %p56 = scmp.ne.s32.totalorder %s42, %s43
      %p57 = scmp.eq.s32.totalorder %s21, 7
      %p58 = por %p56, %p57
      %p60 = scmp.ne.s32.totalorder %s43, %s59
      %p61 = scmp.eq.s32.totalorder %s21, 0
      %p62 = por %p60, %p61
      %s64 = sadd.s32 %s63, 1
      %p67 = scmp.eq.s32.totalorder %s15, 7
      %p68 = scmp.ne.s32.totalorder %s63, %s65
      %p69 = scmp.eq.s32.totalorder %s15, 0
      %p70 = por %p68, %p69
      %p71 = scmp.ne.s32.totalorder %s63, %s65
      %p72 = scmp.eq.s32.totalorder %s20, 7
      %p73 = por %p71, %p72
      %p74 = scmp.ne.s32.totalorder %s65, %s66
      %p75 = scmp.eq.s32.totalorder %s20, 0
      %p76 = por %p74, %p75
      %p77 = scmp.ne.s32.totalorder %s65, %s66
      %p78 = scmp.eq.s32.totalorder %s21, 7
      %p79 = por %p77, %p78
      %p81 = scmp.ne.s32.totalorder %s66, %s80
      %p82 = scmp.eq.s32.totalorder %s21, 0
      %p83 = por %p81, %p82
      %s85 = sadd.s32 %s84, 1
      %p88 = scmp.eq.s32.totalorder %s15, 7
      %p89 = scmp.ne.s32.totalorder %s84, %s86
      %p90 = scmp.eq.s32.totalorder %s15, 0
      %p91 = por %p89, %p90
      %p92 = scmp.ne.s32.totalorder %s84, %s86
      %p93 = scmp.eq.s32.totalorder %s20, 7
      %p94 = por %p92, %p93
      %p95 = scmp.ne.s32.totalorder %s86, %s87
      %p96 = scmp.eq.s32.totalorder %s20, 0
      %p97 = por %p95, %p96
      %p98 = scmp.ne.s32.totalorder %s86, %s87
      %p99 = scmp.eq.s32.totalorder %s21, 7
      %p100 = por %p98, %p99
      %p102 = scmp.ne.s32.totalorder %s87, %s101
      %p103 = scmp.eq.s32.totalorder %s21, 0
      %p104 = por %p102, %p103
      %s106 = sadd.s32 %s105, 1
      %p109 = scmp.eq.s32.totalorder %s15, 7
      %p110 = scmp.ne.s32.totalorder %s105, %s107
      %p111 = scmp.eq.s32.totalorder %s15, 0
      %p112 = por %p110, %p111
      %p113 = scmp.ne.s32.totalorder %s105, %s107
      %p114 = scmp.eq.s32.totalorder %s20, 7
      %p115 = por %p113, %p114
      %p116 = scmp.ne.s32.totalorder %s107, %s108
      %p117 = scmp.eq.s32.totalorder %s20, 0
      %p118 = por %p116, %p117
      %p119 = scmp.ne.s32.totalorder %s107, %s108
      %p120 = scmp.eq.s32.totalorder %s21, 7
      %p121 = por %p119, %p120
      %p123 = scmp.ne.s32.totalorder %s108, %s122
      %p124 = scmp.eq.s32.totalorder %s21, 0
      %p125 = por %p123, %p124
      %s127 = sadd.s32 %s126, 1
      %p130 = scmp.eq.s32.totalorder %s15, 7
      %p131 = scmp.ne.s32.totalorder %s126, %s128
      %p132 = scmp.eq.s32.totalorder %s15, 0
      %p133 = por %p131, %p132
      %p134 = scmp.ne.s32.totalorder %s126, %s128
      %p135 = scmp.eq.s32.totalorder %s20, 7
      %p136 = por %p134, %p135
      %p137 = scmp.ne.s32.totalorder %s128, %s129
      %p138 = scmp.eq.s32.totalorder %s20, 0
      %p139 = por %p137, %p138
      %p140 = scmp.ne.s32.totalorder %s128, %s129
      %p141 = scmp.eq.s32.totalorder %s21, 7
      %p142 = por %p140, %p141
      %p144 = scmp.ne.s32.totalorder %s129, %s143
      %p145 = scmp.eq.s32.totalorder %s21, 0
      %p146 = por %p144, %p145
      %s147 = ssub.s32 %s22, %s34
      %s148 = ssub.s32 %s23, %s30
      %s149 = sor.u32 %s147, %s148
      %p150 = scmp.eq.s32.totalorder %s149, 0
      %s152 = sadd.s32 %s151, 1
      %s153 = scalar_select %p150, %s151, %s152
      %p156 = pneg %p150
      %p157 = scmp.eq.s32.totalorder %s15, 7
      %p158 = por %p156, %p157
      %p159 = scmp.ne.s32.totalorder %s151, %s154
      %p160 = scmp.eq.s32.totalorder %s15, 0
      %p161 = por %p159, %p160
      %p162 = scmp.ne.s32.totalorder %s151, %s154
      %p163 = scmp.eq.s32.totalorder %s20, 7
      %p164 = por %p162, %p163
      %p165 = scmp.ne.s32.totalorder %s154, %s155
      %p166 = scmp.eq.s32.totalorder %s20, 0
      %p167 = por %p165, %p166
      %p168 = scmp.ne.s32.totalorder %s154, %s155
      %p169 = scmp.eq.s32.totalorder %s21, 7
      %p170 = por %p168, %p169
      %p172 = scmp.ne.s32.totalorder %s155, %s171
      %p173 = scmp.eq.s32.totalorder %s21, 0
      %p174 = por %p172, %p173
      %p175 = scmp.le.s32.totalorder 1, %s15
      %p176 = scmp.lt.s32.totalorder %s15, 9
      %p177 = pnand %p175, %p176
      %p178 = pneg %p177
      // Predicated region
      $region9: #{tpu_custom_call.1} parent=5 // pred_check
        _
      $region10: #{tpu_custom_call.1} parent=5 // pred_check_branch
        %180 = sbr.rel (%p177) target = $region12
      $region11: #{tpu_custom_call.1} parent=5 // pred_region
        %s181 = ssub.s32 %s15, 1
        // Predicated region
        $region13: #{tpu_custom_call.1} parent=11 // pred_check
          %p182 = pneg %p76
        $region14: #{tpu_custom_call.1} parent=11 // pred_check_branch
          %184 = sbr.rel (%p182) target = $region16
        $region15: #{tpu_custom_call.1} parent=11 // pred_region
          _
        $region16: #{tpu_custom_call.1} parent=11 // pred_fallthru
          _
        // Predicated region
        $region17: #{tpu_custom_call.1} parent=11 // pred_check
          %p185 = pneg %p97
        $region18: #{tpu_custom_call.1} parent=11 // pred_check_branch
          %187 = sbr.rel (%p185) target = $region20
        $region19: #{tpu_custom_call.1} parent=11 // pred_region
          _
        $region20: #{tpu_custom_call.1} parent=11 // pred_fallthru
          _
        // Predicated region
        $region21: #{tpu_custom_call.1} parent=11 // pred_check
          %p188 = pneg %p118
        $region22: #{tpu_custom_call.1} parent=11 // pred_check_branch
          %190 = sbr.rel (%p188) target = $region24
        $region23: #{tpu_custom_call.1} parent=11 // pred_region
          %s192 = ssub.s32 18432, 18432
          %193 = vsyncadd [#allocation4], %s192
          %s194 = sshll.u32 [#allocation3], 4
          %s195 = int_to_ptr.vmem [resolvable:$true] %s194
          %200 = dma.hbm_to_vmem [thread:$0]  %s3, 18432, %s195, [#allocation4], 128, 128, 8
        $region24: #{tpu_custom_call.1} parent=11 // pred_fallthru
          _
        // Predicated region
        $region25: #{tpu_custom_call.1} parent=11 // pred_check
          %p201 = pneg %p139
        $region26: #{tpu_custom_call.1} parent=11 // pred_check_branch
          %203 = sbr.rel (%p201) target = $region28
        $region27: #{tpu_custom_call.1} parent=11 // pred_region
          _
        $region28: #{tpu_custom_call.1} parent=11 // pred_fallthru
          _
      $region12: #{tpu_custom_call.1} parent=5 // pred_fallthru
        _
      %p204 = scmp.lt.s32.totalorder %s15, 8
      // Predicated region
      $region29: #{tpu_custom_call.1} parent=5 // pred_check
        %p205 = pneg %p204
      $region30: #{tpu_custom_call.1} parent=5 // pred_check_branch
        %207 = sbr.rel (%p205) target = $region32
      $region31: #{tpu_custom_call.1} parent=5 // pred_region
        // Predicated region
        $region33: #{tpu_custom_call.1} parent=31 // pred_check
          %p208 = pneg %p49
        $region34: #{tpu_custom_call.1} parent=31 // pred_check_branch
          %210 = sbr.rel (%p208) target = $region36
        $region35: #{tpu_custom_call.1} parent=31 // pred_region
          %p211 = scmp.lt.s32.totalorder %s22, 1
          %s212 = scalar_select %p211, %s22, 1
          %p213 = scmp.lt.s32.totalorder %s23, 3
          %s214 = scalar_select %p213, %s23, 3
          %s215 = smul.addr %s214, 8
          %s216 = smul.addr %s212, 32
          %s217 = sadd.s32 %s215, %s216
          %s218 = smul.addr %s217, 8
          %s219 = scalar_lea.vmem %s0, %s218
        $region36: #{tpu_custom_call.1} parent=31 // pred_fallthru
          _
      $region32: #{tpu_custom_call.1} parent=5 // pred_fallthru
        _
      %p220 = scmp.le.s32.totalorder 1, %s15
      %p221 = scmp.lt.s32.totalorder %s15, 9
      %p222 = pnand %p220, %p221
      %p223 = pneg %p222
      // Predicated region
      $region37: #{tpu_custom_call.1} parent=5 // pred_check
        _
      $region38: #{tpu_custom_call.1} parent=5 // pred_check_branch
        %225 = sbr.rel (%p222) target = $region40
      $region39: #{tpu_custom_call.1} parent=5 // pred_region
        %s226 = ssub.s32 %s15, 1
        // Predicated region
        $region41: #{tpu_custom_call.1} parent=39 // pred_check
          %p227 = pneg %p118
        $region42: #{tpu_custom_call.1} parent=39 // pred_check_branch
          %229 = sbr.rel (%p227) target = $region44
        $region43: #{tpu_custom_call.1} parent=39 // pred_region
          %230 = dma.done [#allocation4], 18432
        $region44: #{tpu_custom_call.1} parent=39 // pred_fallthru
          _
        %p231 = scmp.lt.s32.totalorder %s24, 1
        %s232 = scalar_select %p231, %s24, 1
        %p233 = scmp.lt.s32.totalorder %s25, 3
        %s234 = scalar_select %p233, %s25, 3
        %s235 = smul.addr %s234, 8
        %s236 = smul.addr %s232, 32
        %s237 = sadd.s32 %s235, %s236
        %s238 = smul.addr %s237, 8
        %s239 = scalar_lea.vmem %s0, %s238
        %p240 = pneg %p55
        %p241 = pneg %p52
        %p242 = pneg %p76
        %p243 = pneg %p73
        %p244 = pneg %p97
        %p245 = pneg %p94
        %p246 = pneg %p118
        %p247 = pneg %p115
        %p248 = pneg %p139
        %p249 = pneg %p136
        %p250 = pneg %p167
        %p251 = pneg %p164
        %s252 = sand.u32 %s154, 1
        %s253 = scalar_lea.sflag [#allocation5], %s252
        %s254 = sand.u32 %s154, 1
        %s255 = smul.addr %s254, 64
        %s256 = scalar_lea.vmem [#allocation6], %s255
        %p257 = scmp.lt.s32.totalorder %s24, 1
        %s258 = scalar_select %p257, %s24, 1
        %p259 = scmp.lt.s32.totalorder %s25, 3
        %s260 = scalar_select %p259, %s25, 3
        %s261 = smul.addr %s260, 8
        %s262 = smul.addr %s258, 32
        %s263 = sadd.s32 %s261, %s262
        %s264 = smul.addr %s263, 8
        %s265 = scalar_lea.vmem %s0, %s264
        %v266 = vld [vmem:[%s265] sm:$0xff]
        %v267 = vld [vmem:[%s265 + $0x8] sm:$0xff]
        %v268 = vld [vmem:[%s265 + $0x10] sm:$0xff]
        %v269 = vld [vmem:[%s265 + $0x18] sm:$0xff]
        %v270 = vld [vmem:[%s265 + $0x20] sm:$0xff]
        %v271 = vld [vmem:[%s265 + $0x28] sm:$0xff]
        %v272 = vld [vmem:[%s265 + $0x30] sm:$0xff]
        %v273 = vld [vmem:[%s265 + $0x38] sm:$0xff]
        %v274 = vld [vmem:[%s1] sm:$0xff]
        %v275 = vld [vmem:[%s1 + $0x8] sm:$0xff]
        %v276 = vld [vmem:[%s2] sm:$0x1]
        %v278 = vlaneseq
        %v279 = vshrl.u32 %v278, 7
        %v280 = vsub.s32 0, %v279
        %v281 = vrot.slane %v276, %v280
        %vm283 = vcmask 130048
        %v285 = vsel %vm283, %v266, 0
        %v288 = vsel %vm283, %v267, 0
        %v291 = vsel %vm283, %v268, 0
        %v294 = vsel %vm283, %v269, 0
        %v297 = vsel %vm283, %v270, 0
        %v300 = vsel %vm283, %v271, 0
        %v303 = vsel %vm283, %v272, 0
        %v306 = vsel %vm283, %v273, 0
        %308 = vmatprep.subr.mxu0 0.0
        %309 = vmatpush1.msra.mxu0 %v274
        %310 = vmatprep.subr.mxu0 0.0
        %311 = vmatpush1.msra.mxu0 %v275
        %312 = vmatprep.subr.mxu0 0.0
        %313 = vmatpush1.msra.mxu0 0.0
        %314 = vmatprep.subr.mxu0 0.0
        %315 = vmatpush1.msra.mxu0 0.0
        %316 = vmatprep.subr.mxu0 0.0
        %317 = vmatpush1.msra.mxu0 0.0
        %318 = vmatprep.subr.mxu0 0.0
        %319 = vmatpush1.msra.mxu0 0.0
        %320 = vmatprep.subr.mxu0 0.0
        %321 = vmatpush1.msra.mxu0 0.0
        %322 = vmatprep.subr.mxu0 0.0
        %323 = vmatpush1.msra.mxu0 0.0
        %324 = vmatprep.subr.mxu0 0.0
        %325 = vmatpush1.msra.mxu0 0.0
        %326 = vmatprep.subr.mxu0 0.0
        %327 = vmatpush1.msra.mxu0 0.0
        %328 = vmatprep.subr.mxu0 0.0
        %329 = vmatpush1.msra.mxu0 0.0
        %330 = vmatprep.subr.mxu0 0.0
        %331 = vmatpush1.msra.mxu0 0.0
        %332 = vmatprep.subr.mxu0 0.0
        %333 = vmatpush1.msra.mxu0 0.0
        %334 = vmatprep.subr.mxu0 0.0
        %335 = vmatpush1.msra.mxu0 0.0
        %336 = vmatprep.subr.mxu0 0.0
        %337 = vmatpush1.msra.mxu0 0.0
        %338 = vmatprep.subr.mxu0 0.0
        %339 = vmatpush1.msra.mxu0 0.0
        %340 = vmatprep.subr.mxu0 0.0
        %341 = vmatpush1.msra.mxu0 0.0
        %342 = vmatprep.subr.mxu0 0.0
        %343 = vmatpush1.msra.mxu0 0.0
        %344 = vmatprep.subr.mxu0 0.0
        %345 = vmatpush1.msra.mxu0 0.0
        %346 = vmatprep.subr.mxu0 0.0
        %347 = vmatpush1.msra.mxu0 0.0
        %348 = vmatprep.subr.mxu0 0.0
        %349 = vmatpush1.msra.mxu0 0.0
        %350 = vmatprep.subr.mxu0 0.0
        %351 = vmatpush1.msra.mxu0 0.0
        %352 = vmatprep.subr.mxu0 0.0
        %353 = vmatpush1.msra.mxu0 0.0
        %354 = vmatprep.subr.mxu0 0.0
        %355 = vmatpush1.msra.mxu0 0.0
        %356 = vmatprep.subr.mxu0 0.0
        %357 = vmatpush1.msra.mxu0 0.0
        %358 = vmatprep.subr.mxu0 0.0
        %359 = vmatpush1.msra.mxu0 0.0
        %360 = vmatprep.subr.mxu0 0.0
        %361 = vmatpush1.msra.mxu0 0.0
        %362 = vmatprep.subr.mxu0 0.0
        %363 = vmatpush1.msra.mxu0 0.0
        %364 = vmatprep.subr.mxu0 0.0
        %365 = vmatpush1.msra.mxu0 0.0
        %366 = vmatprep.subr.mxu0 0.0
        %367 = vmatpush1.msra.mxu0 0.0
        %368 = vmatprep.subr.mxu0 0.0
        %369 = vmatpush1.msra.mxu0 0.0
        %370 = vmatprep.subr.mxu0 0.0
        %371 = vmatpush1.msra.mxu0 0.0
        %372 = vmatprep.mubr.f32.mxu0 0.0
        %373 = vmatmul.mubr.f32.gmra.mrb[0].mxu0 %v285
        %v374 = vpop.f32.mrb[0].mxu0
        %v375 = vadd.f32 %v281, %v374
        %v376 = vpop.f32.mrb[0].mxu0
        %377 = vmatprep.mubr.f32.mxu0 0.0
        %378 = vmatmul.mubr.f32.gmra.mrb[0].mxu0 %v288
        %v379 = vpop.f32.mrb[0].mxu0
        %v380 = vadd.f32 %v281, %v379
        %v381 = vpop.f32.mrb[0].mxu0
        %382 = vmatprep.mubr.f32.mxu0 0.0
        %383 = vmatmul.mubr.f32.gmra.mrb[0].mxu0 %v291
        %v384 = vpop.f32.mrb[0].mxu0
        %v385 = vadd.f32 %v281, %v384
        %v386 = vpop.f32.mrb[0].mxu0
        %387 = vmatprep.mubr.f32.mxu0 0.0
        %388 = vmatmul.mubr.f32.gmra.mrb[0].mxu0 %v294
        %v389 = vpop.f32.mrb[0].mxu0
        %v390 = vadd.f32 %v281, %v389
        %v391 = vpop.f32.mrb[0].mxu0
        %392 = vmatprep.mubr.f32.mxu0 0.0
        %393 = vmatmul.mubr.f32.gmra.mrb[0].mxu0 %v297
        %v394 = vpop.f32.mrb[0].mxu0
        %v395 = vadd.f32 %v281, %v394
        %v396 = vpop.f32.mrb[0].mxu0
        %397 = vmatprep.mubr.f32.mxu0 0.0
        %398 = vmatmul.mubr.f32.gmra.mrb[0].mxu0 %v300
        %v399 = vpop.f32.mrb[0].mxu0
        %v400 = vadd.f32 %v281, %v399
        %v401 = vpop.f32.mrb[0].mxu0
        %402 = vmatprep.mubr.f32.mxu0 0.0
        %403 = vmatmul.mubr.f32.gmra.mrb[0].mxu0 %v303
        %v404 = vpop.f32.mrb[0].mxu0
        %v405 = vadd.f32 %v281, %v404
        %v406 = vpop.f32.mrb[0].mxu0
        %407 = vmatprep.mubr.f32.mxu0 0.0
        %408 = vmatmul.mubr.f32.gmra.mrb[0].mxu0 %v306
        %v409 = vpop.f32.mrb[0].mxu0
        %v410 = vadd.f32 %v281, %v409
        %v411 = vpop.f32.mrb[0].mxu0
        %412 = vdwg.mxu0
        %v413 = vmax.f32 %v375, 0.0
        %v414 = vmax.f32 %v380, 0.0
        %v415 = vmax.f32 %v385, 0.0
        %v416 = vmax.f32 %v390, 0.0
        %v417 = vmax.f32 %v395, 0.0
        %v418 = vmax.f32 %v400, 0.0
        %v419 = vmax.f32 %v405, 0.0
        %v420 = vmax.f32 %v410, 0.0
        %421 = vst [vmem:[#allocation2] sm:$0xff] 0.0
        %422 = vst [vmem:[#allocation2 + $0x8] sm:$0xff] 0.0
        %423 = vst [vmem:[#allocation2 + $0x10] sm:$0xff] 0.0
        %424 = vst [vmem:[#allocation2 + $0x18] sm:$0xff] 0.0
        %425 = vst [vmem:[#allocation2 + $0x20] sm:$0xff] 0.0
        %426 = vst [vmem:[#allocation2 + $0x28] sm:$0xff] 0.0
        %427 = vst [vmem:[#allocation2 + $0x30] sm:$0xff] 0.0
        %428 = vst [vmem:[#allocation2 + $0x38] sm:$0xff] 0.0
        %429 = vst [vmem:[#allocation2 + $0x40] sm:$0xff] 0.0
        %430 = vst [vmem:[#allocation2 + $0x48] sm:$0xff] 0.0
        %431 = vst [vmem:[#allocation2 + $0x50] sm:$0xff] 0.0
        %432 = vst [vmem:[#allocation2 + $0x58] sm:$0xff] 0.0
        %433 = vst [vmem:[#allocation2 + $0x60] sm:$0xff] 0.0
        %434 = vst [vmem:[#allocation2 + $0x68] sm:$0xff] 0.0
        %435 = vst [vmem:[#allocation2 + $0x70] sm:$0xff] 0.0
        %436 = vst [vmem:[#allocation2 + $0x78] sm:$0xff] 0.0
        %437 = vst [vmem:[#allocation2 + $0x80] sm:$0xff] 0.0
        %438 = vst [vmem:[#allocation2 + $0x88] sm:$0xff] 0.0
        %439 = vst [vmem:[#allocation2 + $0x90] sm:$0xff] 0.0
        %440 = vst [vmem:[#allocation2 + $0x98] sm:$0xff] 0.0
        %441 = vst [vmem:[#allocation2 + $0xa0] sm:$0xff] 0.0
        %442 = vst [vmem:[#allocation2 + $0xa8] sm:$0xff] 0.0
        %s443 = scalar_lea.vmem [#allocation2], 16
        %444 = vst [vmem:[%s443 + $0x1] sm:$0xff] %v413
        %445 = vst [vmem:[%s443 + $0x11] sm:$0xff] %v414
        %446 = vst [vmem:[%s443 + $0x21] sm:$0xff] %v415
        %447 = vst [vmem:[%s443 + $0x31] sm:$0xff] %v416
        %448 = vst [vmem:[%s443 + $0x41] sm:$0xff] %v417
        %449 = vst [vmem:[%s443 + $0x51] sm:$0xff] %v418
        %450 = vst [vmem:[%s443 + $0x61] sm:$0xff] %v419
        %451 = vst [vmem:[%s443 + $0x71] sm:$0xff] %v420
        %v452 = vld [vmem:[#allocation2] sm:$0xff]
        %v453 = vld [vmem:[#allocation2 + $0x8] sm:$0xff]
        %v454 = vld [vmem:[#allocation2 + $0x10] sm:$0xff]
        %v455 = vld [vmem:[#allocation2 + $0x18] sm:$0xff]
        %v456 = vld [vmem:[#allocation2 + $0x20] sm:$0xff]
        %v457 = vld [vmem:[#allocation2 + $0x28] sm:$0xff]
        %v458 = vld [vmem:[#allocation2 + $0x30] sm:$0xff]
        %v459 = vld [vmem:[#allocation2 + $0x38] sm:$0xff]
        %v460 = vld [vmem:[#allocation2 + $0x40] sm:$0xff]
        %v461 = vld [vmem:[#allocation2 + $0x48] sm:$0xff]
        %v462 = vld [vmem:[#allocation2 + $0x50] sm:$0xff]
        %v463 = vld [vmem:[#allocation2 + $0x58] sm:$0xff]
        %v464 = vld [vmem:[#allocation2 + $0x60] sm:$0xff]
        %v465 = vld [vmem:[#allocation2 + $0x68] sm:$0xff]
        %v466 = vld [vmem:[#allocation2 + $0x70] sm:$0xff]
        %v467 = vld [vmem:[#allocation2 + $0x78] sm:$0xff]
        %v468 = vld [vmem:[#allocation2 + $0x80] sm:$0xff]
        %v469 = vld [vmem:[#allocation2 + $0x88] sm:$0xff]
        %v470 = vld [vmem:[#allocation2 + $0x90] sm:$0xff]
        %v471 = vld [vmem:[#allocation2 + $0x98] sm:$0xff]
        %v472 = vld [vmem:[#allocation2 + $0xa0] sm:$0xff]
        %v473 = vld [vmem:[%s4] sm:$0x1]
        %v474 = vld [vmem:[#allocation3] sm:$0xff]
        %v475 = vld [vmem:[#allocation3 + $0x8] sm:$0xff]
        %v476 = vld [vmem:[#allocation3 + $0x10] sm:$0xff]
        %v477 = vld [vmem:[#allocation3 + $0x18] sm:$0xff]
        %v478 = vld [vmem:[#allocation3 + $0x20] sm:$0xff]
        %v479 = vld [vmem:[#allocation3 + $0x28] sm:$0xff]
        %v480 = vld [vmem:[#allocation3 + $0x30] sm:$0xff]
        %v481 = vld [vmem:[#allocation3 + $0x38] sm:$0xff]
        %v482 = vld [vmem:[#allocation3 + $0x40] sm:$0xff]
        %v483 = vld [vmem:[#allocation3 + $0x48] sm:$0xff]
        %v484 = vld [vmem:[#allocation3 + $0x50] sm:$0xff]
        %v485 = vld [vmem:[#allocation3 + $0x58] sm:$0xff]
        %v486 = vld [vmem:[#allocation3 + $0x60] sm:$0xff]
        %v487 = vld [vmem:[#allocation3 + $0x68] sm:$0xff]
        %v488 = vld [vmem:[#allocation3 + $0x70] sm:$0xff]
        %v489 = vld [vmem:[#allocation3 + $0x78] sm:$0xff]
        %s490 = scalar_lea.vmem [#allocation3], 128
        %v491 = vld [vmem:[%s490] sm:$0xff]
        %v492 = vld [vmem:[%s490 + $0x8] sm:$0xff]
        %v493 = vld [vmem:[%s490 + $0x10] sm:$0xff]
        %v494 = vld [vmem:[%s490 + $0x18] sm:$0xff]
        %v495 = vld [vmem:[%s490 + $0x20] sm:$0xff]
        %v496 = vld [vmem:[%s490 + $0x28] sm:$0xff]
        %v497 = vld [vmem:[%s490 + $0x30] sm:$0xff]
        %v498 = vld [vmem:[%s490 + $0x38] sm:$0xff]
        %v499 = vld [vmem:[%s490 + $0x40] sm:$0xff]
        %v500 = vld [vmem:[%s490 + $0x48] sm:$0xff]
        %v501 = vld [vmem:[%s490 + $0x50] sm:$0xff]
        %v502 = vld [vmem:[%s490 + $0x58] sm:$0xff]
        %v503 = vld [vmem:[%s490 + $0x60] sm:$0xff]
        %v504 = vld [vmem:[%s490 + $0x68] sm:$0xff]
        %v505 = vld [vmem:[%s490 + $0x70] sm:$0xff]
        %v506 = vld [vmem:[%s490 + $0x78] sm:$0xff]
        %vm524 = vcmask 1046528
        %v525 = vrot.slane %v452, 1
        %v526 = vrot.slane %v453, 1
        %v527 = vsel %vm524, %v525, %v526
        %v528 = vrot.slane %v454, 1
        %v529 = vsel %vm524, %v526, %v528
        %v530 = vrot.slane %v455, 1
        %v531 = vsel %vm524, %v528, %v530
        %v532 = vrot.slane %v456, 1
        %v533 = vsel %vm524, %v530, %v532
        %v534 = vrot.slane %v457, 1
        %v535 = vsel %vm524, %v532, %v534
        %v536 = vrot.slane %v458, 1
        %v537 = vsel %vm524, %v534, %v536
        %v538 = vrot.slane %v459, 1
        %v539 = vsel %vm524, %v536, %v538
        %v540 = vrot.slane %v460, 1
        %v541 = vsel %vm524, %v538, %v540
        %v542 = vrot.slane %v461, 1
        %v543 = vsel %vm524, %v540, %v542
        %v544 = vrot.slane %v462, 1
        %v545 = vsel %vm524, %v542, %v544
        %v546 = vrot.slane %v463, 1
        %v547 = vsel %vm524, %v544, %v546
        %v548 = vrot.slane %v464, 1
        %v549 = vsel %vm524, %v546, %v548
        %v550 = vrot.slane %v465, 1
        %v551 = vsel %vm524, %v548, %v550
        %v552 = vrot.slane %v466, 1
        %v553 = vsel %vm524, %v550, %v552
        %v554 = vrot.slane %v467, 1
        %v555 = vsel %vm524, %v552, %v554
        %v556 = vrot.slane %v468, 1
        %v557 = vsel %vm524, %v554, %v556
        %574 = vmatprep.subr.mxu0 0.0
        %575 = vmatpush1.msra.mxu0 %v491
        %576 = vmatprep.subr.mxu0 0.0
        %577 = vmatpush1.msra.mxu0 %v492
        %578 = vmatprep.subr.mxu0 0.0
        %579 = vmatpush1.msra.mxu0 %v493
        %580 = vmatprep.subr.mxu0 0.0
        %581 = vmatpush1.msra.mxu0 %v494
        %582 = vmatprep.subr.mxu0 0.0
        %583 = vmatpush1.msra.mxu0 %v495
        %584 = vmatprep.subr.mxu0 0.0
        %585 = vmatpush1.msra.mxu0 %v496
        %586 = vmatprep.subr.mxu0 0.0
        %587 = vmatpush1.msra.mxu0 %v497
        %588 = vmatprep.subr.mxu0 0.0
        %589 = vmatpush1.msra.mxu0 %v498
        %590 = vmatprep.subr.mxu0 0.0
        %591 = vmatpush1.msra.mxu0 %v499
        %592 = vmatprep.subr.mxu0 0.0
        %593 = vmatpush1.msra.mxu0 %v500
        %594 = vmatprep.subr.mxu0 0.0
        %595 = vmatpush1.msra.mxu0 %v501
        %596 = vmatprep.subr.mxu0 0.0
        %597 = vmatpush1.msra.mxu0 %v502
        %598 = vmatprep.subr.mxu0 0.0
        %599 = vmatpush1.msra.mxu0 %v503
        %600 = vmatprep.subr.mxu0 0.0
        %601 = vmatpush1.msra.mxu0 %v504
        %602 = vmatprep.subr.mxu0 0.0
        %603 = vmatpush1.msra.mxu0 %v505
        %604 = vmatprep.subr.mxu0 0.0
        %605 = vmatpush1.msra.mxu0 %v506
        %606 = vmatprep.subr.mxu0 0.0
        %607 = vmatpush1.msra.mxu0 0.0
        %608 = vmatprep.subr.mxu0 0.0
        %609 = vmatpush1.msra.mxu0 0.0
        %610 = vmatprep.subr.mxu0 0.0
        %611 = vmatpush1.msra.mxu0 0.0
        %612 = vmatprep.subr.mxu0 0.0
        %613 = vmatpush1.msra.mxu0 0.0
        %614 = vmatprep.subr.mxu0 0.0
        %615 = vmatpush1.msra.mxu0 0.0
        %616 = vmatprep.subr.mxu0 0.0
        %617 = vmatpush1.msra.mxu0 0.0
        %618 = vmatprep.subr.mxu0 0.0
        %619 = vmatpush1.msra.mxu0 0.0
        %620 = vmatprep.subr.mxu0 0.0
        %621 = vmatpush1.msra.mxu0 0.0
        %622 = vmatprep.subr.mxu0 0.0
        %623 = vmatpush1.msra.mxu0 0.0
        %624 = vmatprep.subr.mxu0 0.0
        %625 = vmatpush1.msra.mxu0 0.0
        %626 = vmatprep.subr.mxu0 0.0
        %627 = vmatpush1.msra.mxu0 0.0
        %628 = vmatprep.subr.mxu0 0.0
        %629 = vmatpush1.msra.mxu0 0.0
        %630 = vmatprep.subr.mxu0 0.0
        %631 = vmatpush1.msra.mxu0 0.0
        %632 = vmatprep.subr.mxu0 0.0
        %633 = vmatpush1.msra.mxu0 0.0
        %634 = vmatprep.subr.mxu0 0.0
        %635 = vmatpush1.msra.mxu0 0.0
        %636 = vmatprep.subr.mxu0 0.0
        %637 = vmatpush1.msra.mxu0 0.0
        %638 = vmatprep.mubr.f32.mxu0 0.0
        %639 = vmatmul.mubr.f32.gmra.mrb[0].mxu0 %v527
        %v640 = vpop.f32.mrb[0].mxu0
        %v641 = vadd.f32 0.0, %v640
        %v642 = vpop.f32.mrb[0].mxu0
        %643 = vmatprep.mubr.f32.mxu0 0.0
        %644 = vmatmul.mubr.f32.gmra.mrb[0].mxu0 %v529
        %v645 = vpop.f32.mrb[0].mxu0
        %v646 = vpop.f32.mrb[0].mxu0
        %647 = vmatprep.mubr.f32.mxu0 0.0
        %648 = vmatmul.mubr.f32.gmra.mrb[0].mxu0 %v531
        %v649 = vpop.f32.mrb[0].mxu0
        %v650 = vadd.f32 0.0, %v649
        %v651 = vpop.f32.mrb[0].mxu0
        %652 = vmatprep.mubr.f32.mxu0 0.0
        %653 = vmatmul.mubr.f32.gmra.mrb[0].mxu0 %v533
        %v654 = vpop.f32.mrb[0].mxu0
        %v655 = vpop.f32.mrb[0].mxu0
        %656 = vmatprep.mubr.f32.mxu0 0.0
        %657 = vmatmul.mubr.f32.gmra.mrb[0].mxu0 %v535
        %v658 = vpop.f32.mrb[0].mxu0
        %v659 = vadd.f32 0.0, %v658
        %v660 = vpop.f32.mrb[0].mxu0
        %661 = vmatprep.mubr.f32.mxu0 0.0
        %662 = vmatmul.mubr.f32.gmra.mrb[0].mxu0 %v537
        %v663 = vpop.f32.mrb[0].mxu0
        %v664 = vpop.f32.mrb[0].mxu0
        %665 = vmatprep.mubr.f32.mxu0 0.0
        %666 = vmatmul.mubr.f32.gmra.mrb[0].mxu0 %v539
        %v667 = vpop.f32.mrb[0].mxu0
        %v668 = vadd.f32 0.0, %v667
        %v669 = vpop.f32.mrb[0].mxu0
        %670 = vmatprep.mubr.f32.mxu0 0.0
        %671 = vmatmul.mubr.f32.gmra.mrb[0].mxu0 %v541
        %v672 = vpop.f32.mrb[0].mxu0
        %v673 = vpop.f32.mrb[0].mxu0
        %674 = vmatprep.mubr.f32.mxu0 0.0
        %675 = vmatmul.mubr.f32.gmra.mrb[0].mxu0 %v543
        %v676 = vpop.f32.mrb[0].mxu0
        %v677 = vadd.f32 0.0, %v676
        %v678 = vpop.f32.mrb[0].mxu0
        %679 = vmatprep.mubr.f32.mxu0 0.0
        %680 = vmatmul.mubr.f32.gmra.mrb[0].mxu0 %v545
        %v681 = vpop.f32.mrb[0].mxu0
        %v682 = vpop.f32.mrb[0].mxu0
        %683 = vmatprep.mubr.f32.mxu0 0.0
        %684 = vmatmul.mubr.f32.gmra.mrb[0].mxu0 %v547
        %v685 = vpop.f32.mrb[0].mxu0
        %v686 = vadd.f32 0.0, %v685
        %v687 = vpop.f32.mrb[0].mxu0
        %688 = vmatprep.mubr.f32.mxu0 0.0
        %689 = vmatmul.mubr.f32.gmra.mrb[0].mxu0 %v549
        %v690 = vpop.f32.mrb[0].mxu0
        %v691 = vpop.f32.mrb[0].mxu0
        %692 = vmatprep.mubr.f32.mxu0 0.0
        %693 = vmatmul.mubr.f32.gmra.mrb[0].mxu0 %v551
        %v694 = vpop.f32.mrb[0].mxu0
        %v695 = vadd.f32 0.0, %v694
        %v696 = vpop.f32.mrb[0].mxu0
        %697 = vmatprep.mubr.f32.mxu0 0.0
        %698 = vmatmul.mubr.f32.gmra.mrb[0].mxu0 %v553
        %v699 = vpop.f32.mrb[0].mxu0
        %v700 = vpop.f32.mrb[0].mxu0
        %701 = vmatprep.mubr.f32.mxu0 0.0
        %702 = vmatmul.mubr.f32.gmra.mrb[0].mxu0 %v555
        %v703 = vpop.f32.mrb[0].mxu0
        %v704 = vadd.f32 0.0, %v703
        %v705 = vpop.f32.mrb[0].mxu0
        %706 = vmatprep.mubr.f32.mxu0 0.0
        %707 = vmatmul.mubr.f32.gmra.mrb[0].mxu0 %v557
        %v708 = vpop.f32.mrb[0].mxu0
        %v709 = vpop.f32.mrb[0].mxu0
        %710 = vdwg.mxu0
        %711 = vmatprep.subr.mxu0 0.0
        %712 = vmatpush1.msra.mxu0 %v474
        %713 = vmatprep.subr.mxu0 0.0
        %714 = vmatpush1.msra.mxu0 %v475
        %715 = vmatprep.subr.mxu0 0.0
        %716 = vmatpush1.msra.mxu0 %v476
        %717 = vmatprep.subr.mxu0 0.0
        %718 = vmatpush1.msra.mxu0 %v477
        %719 = vmatprep.subr.mxu0 0.0
        %720 = vmatpush1.msra.mxu0 %v478
        %721 = vmatprep.subr.mxu0 0.0
        %722 = vmatpush1.msra.mxu0 %v479
        %723 = vmatprep.subr.mxu0 0.0
        %724 = vmatpush1.msra.mxu0 %v480
        %725 = vmatprep.subr.mxu0 0.0
        %726 = vmatpush1.msra.mxu0 %v481
        %727 = vmatprep.subr.mxu0 0.0
        %728 = vmatpush1.msra.mxu0 %v482
        %729 = vmatprep.subr.mxu0 0.0
        %730 = vmatpush1.msra.mxu0 %v483
        %731 = vmatprep.subr.mxu0 0.0
        %732 = vmatpush1.msra.mxu0 %v484
        %733 = vmatprep.subr.mxu0 0.0
        %734 = vmatpush1.msra.mxu0 %v485
        %735 = vmatprep.subr.mxu0 0.0
        %736 = vmatpush1.msra.mxu0 %v486
        %737 = vmatprep.subr.mxu0 0.0
        %738 = vmatpush1.msra.mxu0 %v487
        %739 = vmatprep.subr.mxu0 0.0
        %740 = vmatpush1.msra.mxu0 %v488
        %741 = vmatprep.subr.mxu0 0.0
        %742 = vmatpush1.msra.mxu0 %v489
        %743 = vmatprep.subr.mxu0 0.0
        %744 = vmatpush1.msra.mxu0 0.0
        %745 = vmatprep.subr.mxu0 0.0
        %746 = vmatpush1.msra.mxu0 0.0
        %747 = vmatprep.subr.mxu0 0.0
        %748 = vmatpush1.msra.mxu0 0.0
        %749 = vmatprep.subr.mxu0 0.0
        %750 = vmatpush1.msra.mxu0 0.0
        %751 = vmatprep.subr.mxu0 0.0
        %752 = vmatpush1.msra.mxu0 0.0
        %753 = vmatprep.subr.mxu0 0.0
        %754 = vmatpush1.msra.mxu0 0.0
        %755 = vmatprep.subr.mxu0 0.0
        %756 = vmatpush1.msra.mxu0 0.0
        %757 = vmatprep.subr.mxu0 0.0
        %758 = vmatpush1.msra.mxu0 0.0
        %759 = vmatprep.subr.mxu0 0.0
        %760 = vmatpush1.msra.mxu0 0.0
        %761 = vmatprep.subr.mxu0 0.0
        %762 = vmatpush1.msra.mxu0 0.0
        %763 = vmatprep.subr.mxu0 0.0
        %764 = vmatpush1.msra.mxu0 0.0
        %765 = vmatprep.subr.mxu0 0.0
        %766 = vmatpush1.msra.mxu0 0.0
        %767 = vmatprep.subr.mxu0 0.0
        %768 = vmatpush1.msra.mxu0 0.0
        %769 = vmatprep.subr.mxu0 0.0
        %770 = vmatpush1.msra.mxu0 0.0
        %771 = vmatprep.subr.mxu0 0.0
        %772 = vmatpush1.msra.mxu0 0.0
        %773 = vmatprep.subr.mxu0 0.0
        %774 = vmatpush1.msra.mxu0 0.0
        %775 = vmatprep.mubr.f32.mxu0 0.0
        %776 = vmatmul.mubr.f32.gmra.mrb[0].mxu0 %v452
        %v777 = vpop.f32.mrb[0].mxu0
        %v778 = vadd.f32 %v641, %v777
        %v779 = vpop.f32.mrb[0].mxu0
        %780 = vmatprep.mubr.f32.mxu0 0.0
        %781 = vmatmul.mubr.f32.gmra.mrb[0].mxu0 %v453
        %v782 = vpop.f32.mrb[0].mxu0
        %v783 = vpop.f32.mrb[0].mxu0
        %784 = vmatprep.mubr.f32.mxu0 0.0
        %785 = vmatmul.mubr.f32.gmra.mrb[0].mxu0 %v454
        %v786 = vpop.f32.mrb[0].mxu0
        %v787 = vadd.f32 %v650, %v786
        %v788 = vpop.f32.mrb[0].mxu0
        %789 = vmatprep.mubr.f32.mxu0 0.0
        %790 = vmatmul.mubr.f32.gmra.mrb[0].mxu0 %v455
        %v791 = vpop.f32.mrb[0].mxu0
        %v792 = vpop.f32.mrb[0].mxu0
        %793 = vmatprep.mubr.f32.mxu0 0.0
        %794 = vmatmul.mubr.f32.gmra.mrb[0].mxu0 %v456
        %v795 = vpop.f32.mrb[0].mxu0
        %v796 = vadd.f32 %v659, %v795
        %v797 = vpop.f32.mrb[0].mxu0
        %798 = vmatprep.mubr.f32.mxu0 0.0
        %799 = vmatmul.mubr.f32.gmra.mrb[0].mxu0 %v457
        %v800 = vpop.f32.mrb[0].mxu0
        %v801 = vpop.f32.mrb[0].mxu0
        %802 = vmatprep.mubr.f32.mxu0 0.0
        %803 = vmatmul.mubr.f32.gmra.mrb[0].mxu0 %v458
        %v804 = vpop.f32.mrb[0].mxu0
        %v805 = vadd.f32 %v668, %v804
        %v806 = vpop.f32.mrb[0].mxu0
        %807 = vmatprep.mubr.f32.mxu0 0.0
        %808 = vmatmul.mubr.f32.gmra.mrb[0].mxu0 %v459
        %v809 = vpop.f32.mrb[0].mxu0
        %v810 = vpop.f32.mrb[0].mxu0
        %811 = vmatprep.mubr.f32.mxu0 0.0
        %812 = vmatmul.mubr.f32.gmra.mrb[0].mxu0 %v460
        %v813 = vpop.f32.mrb[0].mxu0
        %v814 = vadd.f32 %v677, %v813
        %v815 = vpop.f32.mrb[0].mxu0
        %816 = vmatprep.mubr.f32.mxu0 0.0
        %817 = vmatmul.mubr.f32.gmra.mrb[0].mxu0 %v461
        %v818 = vpop.f32.mrb[0].mxu0
        %v819 = vpop.f32.mrb[0].mxu0
        %820 = vmatprep.mubr.f32.mxu0 0.0
        %821 = vmatmul.mubr.f32.gmra.mrb[0].mxu0 %v462
        %v822 = vpop.f32.mrb[0].mxu0
        %v823 = vadd.f32 %v686, %v822
        %v824 = vpop.f32.mrb[0].mxu0
        %825 = vmatprep.mubr.f32.mxu0 0.0
        %826 = vmatmul.mubr.f32.gmra.mrb[0].mxu0 %v463
        %v827 = vpop.f32.mrb[0].mxu0
        %v828 = vpop.f32.mrb[0].mxu0
        %829 = vmatprep.mubr.f32.mxu0 0.0
        %830 = vmatmul.mubr.f32.gmra.mrb[0].mxu0 %v464
        %v831 = vpop.f32.mrb[0].mxu0
        %v832 = vadd.f32 %v695, %v831
        %v833 = vpop.f32.mrb[0].mxu0
        %834 = vmatprep.mubr.f32.mxu0 0.0
        %835 = vmatmul.mubr.f32.gmra.mrb[0].mxu0 %v465
        %v836 = vpop.f32.mrb[0].mxu0
        %v837 = vpop.f32.mrb[0].mxu0
        %838 = vmatprep.mubr.f32.mxu0 0.0
        %839 = vmatmul.mubr.f32.gmra.mrb[0].mxu0 %v466
        %v840 = vpop.f32.mrb[0].mxu0
        %v841 = vadd.f32 %v704, %v840
        %v842 = vpop.f32.mrb[0].mxu0
        %843 = vmatprep.mubr.f32.mxu0 0.0
        %844 = vmatmul.mubr.f32.gmra.mrb[0].mxu0 %v467
        %v845 = vpop.f32.mrb[0].mxu0
        %v846 = vpop.f32.mrb[0].mxu0
        %847 = vdwg.mxu0
        %s848 = scalar_lea.vmem [#allocation3], 256
        %v849 = vld [vmem:[%s848] sm:$0xff]
        %v850 = vld [vmem:[%s848 + $0x8] sm:$0xff]
        %v851 = vld [vmem:[%s848 + $0x10] sm:$0xff]
        %v852 = vld [vmem:[%s848 + $0x18] sm:$0xff]
        %v853 = vld [vmem:[%s848 + $0x20] sm:$0xff]
        %v854 = vld [vmem:[%s848 + $0x28] sm:$0xff]
        %v855 = vld [vmem:[%s848 + $0x30] sm:$0xff]
        %v856 = vld [vmem:[%s848 + $0x38] sm:$0xff]
        %v857 = vld [vmem:[%s848 + $0x40] sm:$0xff]
        %v858 = vld [vmem:[%s848 + $0x48] sm:$0xff]
        %v859 = vld [vmem:[%s848 + $0x50] sm:$0xff]
        %v860 = vld [vmem:[%s848 + $0x58] sm:$0xff]
        %v861 = vld [vmem:[%s848 + $0x60] sm:$0xff]
        %v862 = vld [vmem:[%s848 + $0x68] sm:$0xff]
        %v863 = vld [vmem:[%s848 + $0x70] sm:$0xff]
        %v864 = vld [vmem:[%s848 + $0x78] sm:$0xff]
        %vm865 = vcmask 1045504
        %v866 = vrot.slane %v452, 2
        %v867 = vrot.slane %v453, 2
        %v868 = vsel %vm865, %v866, %v867
        %v869 = vrot.slane %v454, 2
        %v870 = vsel %vm865, %v867, %v869
        %v871 = vrot.slane %v455, 2
        %v872 = vsel %vm865, %v869, %v871
        %v873 = vrot.slane %v456, 2
        %v874 = vsel %vm865, %v871, %v873
        %v875 = vrot.slane %v457, 2
        %v876 = vsel %vm865, %v873, %v875
        %v877 = vrot.slane %v458, 2
        %v878 = vsel %vm865, %v875, %v877
        %v879 = vrot.slane %v459, 2
        %v880 = vsel %vm865, %v877, %v879
        %v881 = vrot.slane %v460, 2
        %v882 = vsel %vm865, %v879, %v881
        %v883 = vrot.slane %v461, 2
        %v884 = vsel %vm865, %v881, %v883
        %v885 = vrot.slane %v462, 2
        %v886 = vsel %vm865, %v883, %v885
        %v887 = vrot.slane %v463, 2
        %v888 = vsel %vm865, %v885, %v887
        %v889 = vrot.slane %v464, 2
        %v890 = vsel %vm865, %v887, %v889
        %v891 = vrot.slane %v465, 2
        %v892 = vsel %vm865, %v889, %v891
        %v893 = vrot.slane %v466, 2
        %v894 = vsel %vm865, %v891, %v893
        %v895 = vrot.slane %v467, 2
        %v896 = vsel %vm865, %v893, %v895
        %v897 = vrot.slane %v468, 2
        %v898 = vsel %vm865, %v895, %v897
        %915 = vmatprep.subr.mxu0 0.0
        %916 = vmatpush1.msra.mxu0 %v849
        %917 = vmatprep.subr.mxu0 0.0
        %918 = vmatpush1.msra.mxu0 %v850
        %919 = vmatprep.subr.mxu0 0.0
        %920 = vmatpush1.msra.mxu0 %v851
        %921 = vmatprep.subr.mxu0 0.0
        %922 = vmatpush1.msra.mxu0 %v852
        %923 = vmatprep.subr.mxu0 0.0
        %924 = vmatpush1.msra.mxu0 %v853
        %925 = vmatprep.subr.mxu0 0.0
        %926 = vmatpush1.msra.mxu0 %v854
        %927 = vmatprep.subr.mxu0 0.0
        %928 = vmatpush1.msra.mxu0 %v855
        %929 = vmatprep.subr.mxu0 0.0
        %930 = vmatpush1.msra.mxu0 %v856
        %931 = vmatprep.subr.mxu0 0.0
        %932 = vmatpush1.msra.mxu0 %v857
        %933 = vmatprep.subr.mxu0 0.0
        %934 = vmatpush1.msra.mxu0 %v858
        %935 = vmatprep.subr.mxu0 0.0
        %936 = vmatpush1.msra.mxu0 %v859
        %937 = vmatprep.subr.mxu0 0.0
        %938 = vmatpush1.msra.mxu0 %v860
        %939 = vmatprep.subr.mxu0 0.0
        %940 = vmatpush1.msra.mxu0 %v861
        %941 = vmatprep.subr.mxu0 0.0
        %942 = vmatpush1.msra.mxu0 %v862
        %943 = vmatprep.subr.mxu0 0.0
        %944 = vmatpush1.msra.mxu0 %v863
        %945 = vmatprep.subr.mxu0 0.0
        %946 = vmatpush1.msra.mxu0 %v864
        %947 = vmatprep.subr.mxu0 0.0
        %948 = vmatpush1.msra.mxu0 0.0
        %949 = vmatprep.subr.mxu0 0.0
        %950 = vmatpush1.msra.mxu0 0.0
        %951 = vmatprep.subr.mxu0 0.0
        %952 = vmatpush1.msra.mxu0 0.0
        %953 = vmatprep.subr.mxu0 0.0
        %954 = vmatpush1.msra.mxu0 0.0
        %955 = vmatprep.subr.mxu0 0.0
        %956 = vmatpush1.msra.mxu0 0.0
        %957 = vmatprep.subr.mxu0 0.0
        %958 = vmatpush1.msra.mxu0 0.0
        %959 = vmatprep.subr.mxu0 0.0
        %960 = vmatpush1.msra.mxu0 0.0
        %961 = vmatprep.subr.mxu0 0.0
        %962 = vmatpush1.msra.mxu0 0.0
        %963 = vmatprep.subr.mxu0 0.0
        %964 = vmatpush1.msra.mxu0 0.0
        %965 = vmatprep.subr.mxu0 0.0
        %966 = vmatpush1.msra.mxu0 0.0
        %967 = vmatprep.subr.mxu0 0.0
        %968 = vmatpush1.msra.mxu0 0.0
        %969 = vmatprep.subr.mxu0 0.0
        %970 = vmatpush1.msra.mxu0 0.0
        %971 = vmatprep.subr.mxu0 0.0
        %972 = vmatpush1.msra.mxu0 0.0
        %973 = vmatprep.subr.mxu0 0.0
        %974 = vmatpush1.msra.mxu0 0.0
        %975 = vmatprep.subr.mxu0 0.0
        %976 = vmatpush1.msra.mxu0 0.0
        %977 = vmatprep.subr.mxu0 0.0
        %978 = vmatpush1.msra.mxu0 0.0
        %979 = vmatprep.mubr.f32.mxu0 0.0
        %980 = vmatmul.mubr.f32.gmra.mrb[0].mxu0 %v868
        %v981 = vpop.f32.mrb[0].mxu0
        %v982 = vadd.f32 0.0, %v981
        %v983 = vpop.f32.mrb[0].mxu0
        %984 = vmatprep.mubr.f32.mxu0 0.0
        %985 = vmatmul.mubr.f32.gmra.mrb[0].mxu0 %v870
        %v986 = vpop.f32.mrb[0].mxu0
        %v987 = vpop.f32.mrb[0].mxu0
        %988 = vmatprep.mubr.f32.mxu0 0.0
        %989 = vmatmul.mubr.f32.gmra.mrb[0].mxu0 %v872
        %v990 = vpop.f32.mrb[0].mxu0
        %v991 = vadd.f32 0.0, %v990
        %v992 = vpop.f32.mrb[0].mxu0
        %993 = vmatprep.mubr.f32.mxu0 0.0
        %994 = vmatmul.mubr.f32.gmra.mrb[0].mxu0 %v874
        %v995 = vpop.f32.mrb[0].mxu0
        %v996 = vpop.f32.mrb[0].mxu0
        %997 = vmatprep.mubr.f32.mxu0 0.0
        %998 = vmatmul.mubr.f32.gmra.mrb[0].mxu0 %v876
        %v999 = vpop.f32.mrb[0].mxu0
        %v1000 = vadd.f32 0.0, %v999
        %v1001 = vpop.f32.mrb[0].mxu0
        %1002 = vmatprep.mubr.f32.mxu0 0.0
        %1003 = vmatmul.mubr.f32.gmra.mrb[0].mxu0 %v878
        %v1004 = vpop.f32.mrb[0].mxu0
        %v1005 = vpop.f32.mrb[0].mxu0
        %1006 = vmatprep.mubr.f32.mxu0 0.0
        %1007 = vmatmul.mubr.f32.gmra.mrb[0].mxu0 %v880
        %v1008 = vpop.f32.mrb[0].mxu0
        %v1009 = vadd.f32 0.0, %v1008
        %v1010 = vpop.f32.mrb[0].mxu0
        %1011 = vmatprep.mubr.f32.mxu0 0.0
        %1012 = vmatmul.mubr.f32.gmra.mrb[0].mxu0 %v882
        %v1013 = vpop.f32.mrb[0].mxu0
        %v1014 = vpop.f32.mrb[0].mxu0
        %1015 = vmatprep.mubr.f32.mxu0 0.0
        %1016 = vmatmul.mubr.f32.gmra.mrb[0].mxu0 %v884
        %v1017 = vpop.f32.mrb[0].mxu0
        %v1018 = vadd.f32 0.0, %v1017
        %v1019 = vpop.f32.mrb[0].mxu0
        %1020 = vmatprep.mubr.f32.mxu0 0.0
        %1021 = vmatmul.mubr.f32.gmra.mrb[0].mxu0 %v886
        %v1022 = vpop.f32.mrb[0].mxu0
        %v1023 = vpop.f32.mrb[0].mxu0
        %1024 = vmatprep.mubr.f32.mxu0 0.0
        %1025 = vmatmul.mubr.f32.gmra.mrb[0].mxu0 %v888
        %v1026 = vpop.f32.mrb[0].mxu0
        %v1027 = vadd.f32 0.0, %v1026
        %v1028 = vpop.f32.mrb[0].mxu0
        %1029 = vmatprep.mubr.f32.mxu0 0.0
        %1030 = vmatmul.mubr.f32.gmra.mrb[0].mxu0 %v890
        %v1031 = vpop.f32.mrb[0].mxu0
        %v1032 = vpop.f32.mrb[0].mxu0
        %1033 = vmatprep.mubr.f32.mxu0 0.0
        %1034 = vmatmul.mubr.f32.gmra.mrb[0].mxu0 %v892
        %v1035 = vpop.f32.mrb[0].mxu0
        %v1036 = vadd.f32 0.0, %v1035
        %v1037 = vpop.f32.mrb[0].mxu0
        %1038 = vmatprep.mubr.f32.mxu0 0.0
        %1039 = vmatmul.mubr.f32.gmra.mrb[0].mxu0 %v894
        %v1040 = vpop.f32.mrb[0].mxu0
        %v1041 = vpop.f32.mrb[0].mxu0
        %1042 = vmatprep.mubr.f32.mxu0 0.0
        %1043 = vmatmul.mubr.f32.gmra.mrb[0].mxu0 %v896
        %v1044 = vpop.f32.mrb[0].mxu0
        %v1045 = vadd.f32 0.0, %v1044
        %v1046 = vpop.f32.mrb[0].mxu0
        %1047 = vmatprep.mubr.f32.mxu0 0.0
        %1048 = vmatmul.mubr.f32.gmra.mrb[0].mxu0 %v898
        %v1049 = vpop.f32.mrb[0].mxu0
        %v1050 = vpop.f32.mrb[0].mxu0
        %1051 = vdwg.mxu0
        %v1052 = vadd.f32 %v778, %v982
        %v1053 = vadd.f32 %v787, %v991
        %v1054 = vadd.f32 %v796, %v1000
        %v1055 = vadd.f32 %v805, %v1009
        %v1056 = vadd.f32 %v814, %v1018
        %v1057 = vadd.f32 %v823, %v1027
        %v1058 = vadd.f32 %v832, %v1036
        %v1059 = vadd.f32 %v841, %v1045
        %s1060 = scalar_lea.vmem [#allocation3], 384
        %v1061 = vld [vmem:[%s1060] sm:$0xff]
        %v1062 = vld [vmem:[%s1060 + $0x8] sm:$0xff]
        %v1063 = vld [vmem:[%s1060 + $0x10] sm:$0xff]
        %v1064 = vld [vmem:[%s1060 + $0x18] sm:$0xff]
        %v1065 = vld [vmem:[%s1060 + $0x20] sm:$0xff]
        %v1066 = vld [vmem:[%s1060 + $0x28] sm:$0xff]
        %v1067 = vld [vmem:[%s1060 + $0x30] sm:$0xff]
        %v1068 = vld [vmem:[%s1060 + $0x38] sm:$0xff]
        %v1069 = vld [vmem:[%s1060 + $0x40] sm:$0xff]
        %v1070 = vld [vmem:[%s1060 + $0x48] sm:$0xff]
        %v1071 = vld [vmem:[%s1060 + $0x50] sm:$0xff]
        %v1072 = vld [vmem:[%s1060 + $0x58] sm:$0xff]
        %v1073 = vld [vmem:[%s1060 + $0x60] sm:$0xff]
        %v1074 = vld [vmem:[%s1060 + $0x68] sm:$0xff]
        %v1075 = vld [vmem:[%s1060 + $0x70] sm:$0xff]
        %v1076 = vld [vmem:[%s1060 + $0x78] sm:$0xff]
        %1077 = vmatprep.subr.mxu0 0.0
        %1078 = vmatpush1.msra.mxu0 %v1061
        %1079 = vmatprep.subr.mxu0 0.0
        %1080 = vmatpush1.msra.mxu0 %v1062
        %1081 = vmatprep.subr.mxu0 0.0
        %1082 = vmatpush1.msra.mxu0 %v1063
        %1083 = vmatprep.subr.mxu0 0.0
        %1084 = vmatpush1.msra.mxu0 %v1064
        %1085 = vmatprep.subr.mxu0 0.0
        %1086 = vmatpush1.msra.mxu0 %v1065
        %1087 = vmatprep.subr.mxu0 0.0
        %1088 = vmatpush1.msra.mxu0 %v1066
        %1089 = vmatprep.subr.mxu0 0.0
        %1090 = vmatpush1.msra.mxu0 %v1067
        %1091 = vmatprep.subr.mxu0 0.0
        %1092 = vmatpush1.msra.mxu0 %v1068
        %1093 = vmatprep.subr.mxu0 0.0
        %1094 = vmatpush1.msra.mxu0 %v1069
        %1095 = vmatprep.subr.mxu0 0.0
        %1096 = vmatpush1.msra.mxu0 %v1070
        %1097 = vmatprep.subr.mxu0 0.0
        %1098 = vmatpush1.msra.mxu0 %v1071
        %1099 = vmatprep.subr.mxu0 0.0
        %1100 = vmatpush1.msra.mxu0 %v1072
        %1101 = vmatprep.subr.mxu0 0.0
        %1102 = vmatpush1.msra.mxu0 %v1073
        %1103 = vmatprep.subr.mxu0 0.0
        %1104 = vmatpush1.msra.mxu0 %v1074
        %1105 = vmatprep.subr.mxu0 0.0
        %1106 = vmatpush1.msra.mxu0 %v1075
        %1107 = vmatprep.subr.mxu0 0.0
        %1108 = vmatpush1.msra.mxu0 %v1076
        %1109 = vmatprep.subr.mxu0 0.0
        %1110 = vmatpush1.msra.mxu0 0.0
        %1111 = vmatprep.subr.mxu0 0.0
        %1112 = vmatpush1.msra.mxu0 0.0
        %1113 = vmatprep.subr.mxu0 0.0
        %1114 = vmatpush1.msra.mxu0 0.0
        %1115 = vmatprep.subr.mxu0 0.0
        %1116 = vmatpush1.msra.mxu0 0.0
        %1117 = vmatprep.subr.mxu0 0.0
        %1118 = vmatpush1.msra.mxu0 0.0
        %1119 = vmatprep.subr.mxu0 0.0
        %1120 = vmatpush1.msra.mxu0 0.0
        %1121 = vmatprep.subr.mxu0 0.0
        %1122 = vmatpush1.msra.mxu0 0.0
        %1123 = vmatprep.subr.mxu0 0.0
        %1124 = vmatpush1.msra.mxu0 0.0
        %1125 = vmatprep.subr.mxu0 0.0
        %1126 = vmatpush1.msra.mxu0 0.0
        %1127 = vmatprep.subr.mxu0 0.0
        %1128 = vmatpush1.msra.mxu0 0.0
        %1129 = vmatprep.subr.mxu0 0.0
        %1130 = vmatpush1.msra.mxu0 0.0
        %1131 = vmatprep.subr.mxu0 0.0
        %1132 = vmatpush1.msra.mxu0 0.0
        %1133 = vmatprep.subr.mxu0 0.0
        %1134 = vmatpush1.msra.mxu0 0.0
        %1135 = vmatprep.subr.mxu0 0.0
        %1136 = vmatpush1.msra.mxu0 0.0
        %1137 = vmatprep.subr.mxu0 0.0
        %1138 = vmatpush1.msra.mxu0 0.0
        %1139 = vmatprep.subr.mxu0 0.0
        %1140 = vmatpush1.msra.mxu0 0.0
        %1141 = vmatprep.mubr.f32.mxu0 0.0
        %1142 = vmatmul.mubr.f32.gmra.mrb[0].mxu0 %v454
        %v1143 = vpop.f32.mrb[0].mxu0
        %v1144 = vadd.f32 0.0, %v1143
        %v1145 = vpop.f32.mrb[0].mxu0
        %1146 = vmatprep.mubr.f32.mxu0 0.0
        %1147 = vmatmul.mubr.f32.gmra.mrb[0].mxu0 %v455
        %v1148 = vpop.f32.mrb[0].mxu0
        %v1149 = vpop.f32.mrb[0].mxu0
        %1150 = vmatprep.mubr.f32.mxu0 0.0
        %1151 = vmatmul.mubr.f32.gmra.mrb[0].mxu0 %v456
        %v1152 = vpop.f32.mrb[0].mxu0
        %v1153 = vadd.f32 0.0, %v1152
        %v1154 = vpop.f32.mrb[0].mxu0
        %1155 = vmatprep.mubr.f32.mxu0 0.0
        %1156 = vmatmul.mubr.f32.gmra.mrb[0].mxu0 %v457
        %v1157 = vpop.f32.mrb[0].mxu0
        %v1158 = vpop.f32.mrb[0].mxu0
        %1159 = vmatprep.mubr.f32.mxu0 0.0
        %1160 = vmatmul.mubr.f32.gmra.mrb[0].mxu0 %v458
        %v1161 = vpop.f32.mrb[0].mxu0
        %v1162 = vadd.f32 0.0, %v1161
        %v1163 = vpop.f32.mrb[0].mxu0
        %1164 = vmatprep.mubr.f32.mxu0 0.0
        %1165 = vmatmul.mubr.f32.gmra.mrb[0].mxu0 %v459
        %v1166 = vpop.f32.mrb[0].mxu0
        %v1167 = vpop.f32.mrb[0].mxu0
        %1168 = vmatprep.mubr.f32.mxu0 0.0
        %1169 = vmatmul.mubr.f32.gmra.mrb[0].mxu0 %v460
        %v1170 = vpop.f32.mrb[0].mxu0
        %v1171 = vadd.f32 0.0, %v1170
        %v1172 = vpop.f32.mrb[0].mxu0
        %1173 = vmatprep.mubr.f32.mxu0 0.0
        %1174 = vmatmul.mubr.f32.gmra.mrb[0].mxu0 %v461
        %v1175 = vpop.f32.mrb[0].mxu0
        %v1176 = vpop.f32.mrb[0].mxu0
        %1177 = vmatprep.mubr.f32.mxu0 0.0
        %1178 = vmatmul.mubr.f32.gmra.mrb[0].mxu0 %v462
        %v1179 = vpop.f32.mrb[0].mxu0
        %v1180 = vadd.f32 0.0, %v1179
        %v1181 = vpop.f32.mrb[0].mxu0
        %1182 = vmatprep.mubr.f32.mxu0 0.0
        %1183 = vmatmul.mubr.f32.gmra.mrb[0].mxu0 %v463
        %v1184 = vpop.f32.mrb[0].mxu0
        %v1185 = vpop.f32.mrb[0].mxu0
        %1186 = vmatprep.mubr.f32.mxu0 0.0
        %1187 = vmatmul.mubr.f32.gmra.mrb[0].mxu0 %v464
        %v1188 = vpop.f32.mrb[0].mxu0
        %v1189 = vadd.f32 0.0, %v1188
        %v1190 = vpop.f32.mrb[0].mxu0
        %1191 = vmatprep.mubr.f32.mxu0 0.0
        %1192 = vmatmul.mubr.f32.gmra.mrb[0].mxu0 %v465
        %v1193 = vpop.f32.mrb[0].mxu0
        %v1194 = vpop.f32.mrb[0].mxu0
        %1195 = vmatprep.mubr.f32.mxu0 0.0
        %1196 = vmatmul.mubr.f32.gmra.mrb[0].mxu0 %v466
        %v1197 = vpop.f32.mrb[0].mxu0
        %v1198 = vadd.f32 0.0, %v1197
        %v1199 = vpop.f32.mrb[0].mxu0
        %1200 = vmatprep.mubr.f32.mxu0 0.0
        %1201 = vmatmul.mubr.f32.gmra.mrb[0].mxu0 %v467
        %v1202 = vpop.f32.mrb[0].mxu0
        %v1203 = vpop.f32.mrb[0].mxu0
        %1204 = vmatprep.mubr.f32.mxu0 0.0
        %1205 = vmatmul.mubr.f32.gmra.mrb[0].mxu0 %v468
        %v1206 = vpop.f32.mrb[0].mxu0
        %v1207 = vadd.f32 0.0, %v1206
        %v1208 = vpop.f32.mrb[0].mxu0
        %1209 = vmatprep.mubr.f32.mxu0 0.0
        %1210 = vmatmul.mubr.f32.gmra.mrb[0].mxu0 %v469
        %v1211 = vpop.f32.mrb[0].mxu0
        %v1212 = vpop.f32.mrb[0].mxu0
        %1213 = vdwg.mxu0
        %v1214 = vadd.f32 %v1052, %v1144
        %v1215 = vadd.f32 %v1053, %v1153
        %v1216 = vadd.f32 %v1054, %v1162
        %v1217 = vadd.f32 %v1055, %v1171
        %v1218 = vadd.f32 %v1056, %v1180
        %v1219 = vadd.f32 %v1057, %v1189
        %v1220 = vadd.f32 %v1058, %v1198
        %v1221 = vadd.f32 %v1059, %v1207
        %s1222 = scalar_lea.vmem [#allocation3], 512
        %v1223 = vld [vmem:[%s1222] sm:$0xff]
        %v1224 = vld [vmem:[%s1222 + $0x8] sm:$0xff]
        %v1225 = vld [vmem:[%s1222 + $0x10] sm:$0xff]
        %v1226 = vld [vmem:[%s1222 + $0x18] sm:$0xff]
        %v1227 = vld [vmem:[%s1222 + $0x20] sm:$0xff]
        %v1228 = vld [vmem:[%s1222 + $0x28] sm:$0xff]
        %v1229 = vld [vmem:[%s1222 + $0x30] sm:$0xff]
        %v1230 = vld [vmem:[%s1222 + $0x38] sm:$0xff]
        %v1231 = vld [vmem:[%s1222 + $0x40] sm:$0xff]
        %v1232 = vld [vmem:[%s1222 + $0x48] sm:$0xff]
        %v1233 = vld [vmem:[%s1222 + $0x50] sm:$0xff]
        %v1234 = vld [vmem:[%s1222 + $0x58] sm:$0xff]
        %v1235 = vld [vmem:[%s1222 + $0x60] sm:$0xff]
        %v1236 = vld [vmem:[%s1222 + $0x68] sm:$0xff]
        %v1237 = vld [vmem:[%s1222 + $0x70] sm:$0xff]
        %v1238 = vld [vmem:[%s1222 + $0x78] sm:$0xff]
        %v1241 = vrot.slane %v469, 1
        %v1242 = vsel %vm524, %v556, %v1241
        %v1243 = vrot.slane %v470, 1
        %v1244 = vsel %vm524, %v1241, %v1243
        %1247 = vmatprep.subr.mxu0 0.0
        %1248 = vmatpush1.msra.mxu0 %v1223
        %1249 = vmatprep.subr.mxu0 0.0
        %1250 = vmatpush1.msra.mxu0 %v1224
        %1251 = vmatprep.subr.mxu0 0.0
        %1252 = vmatpush1.msra.mxu0 %v1225
        %1253 = vmatprep.subr.mxu0 0.0
        %1254 = vmatpush1.msra.mxu0 %v1226
        %1255 = vmatprep.subr.mxu0 0.0
        %1256 = vmatpush1.msra.mxu0 %v1227
        %1257 = vmatprep.subr.mxu0 0.0
        %1258 = vmatpush1.msra.mxu0 %v1228
        %1259 = vmatprep.subr.mxu0 0.0
        %1260 = vmatpush1.msra.mxu0 %v1229
        %1261 = vmatprep.subr.mxu0 0.0
        %1262 = vmatpush1.msra.mxu0 %v1230
        %1263 = vmatprep.subr.mxu0 0.0
        %1264 = vmatpush1.msra.mxu0 %v1231
        %1265 = vmatprep.subr.mxu0 0.0
        %1266 = vmatpush1.msra.mxu0 %v1232
        %1267 = vmatprep.subr.mxu0 0.0
        %1268 = vmatpush1.msra.mxu0 %v1233
        %1269 = vmatprep.subr.mxu0 0.0
        %1270 = vmatpush1.msra.mxu0 %v1234
        %1271 = vmatprep.subr.mxu0 0.0
        %1272 = vmatpush1.msra.mxu0 %v1235
        %1273 = vmatprep.subr.mxu0 0.0
        %1274 = vmatpush1.msra.mxu0 %v1236
        %1275 = vmatprep.subr.mxu0 0.0
        %1276 = vmatpush1.msra.mxu0 %v1237
        %1277 = vmatprep.subr.mxu0 0.0
        %1278 = vmatpush1.msra.mxu0 %v1238
        %1279 = vmatprep.subr.mxu0 0.0
        %1280 = vmatpush1.msra.mxu0 0.0
        %1281 = vmatprep.subr.mxu0 0.0
        %1282 = vmatpush1.msra.mxu0 0.0
        %1283 = vmatprep.subr.mxu0 0.0
        %1284 = vmatpush1.msra.mxu0 0.0
        %1285 = vmatprep.subr.mxu0 0.0
        %1286 = vmatpush1.msra.mxu0 0.0
        %1287 = vmatprep.subr.mxu0 0.0
        %1288 = vmatpush1.msra.mxu0 0.0
        %1289 = vmatprep.subr.mxu0 0.0
        %1290 = vmatpush1.msra.mxu0 0.0
        %1291 = vmatprep.subr.mxu0 0.0
        %1292 = vmatpush1.msra.mxu0 0.0
        %1293 = vmatprep.subr.mxu0 0.0
        %1294 = vmatpush1.msra.mxu0 0.0
        %1295 = vmatprep.subr.mxu0 0.0
        %1296 = vmatpush1.msra.mxu0 0.0
        %1297 = vmatprep.subr.mxu0 0.0
        %1298 = vmatpush1.msra.mxu0 0.0
        %1299 = vmatprep.subr.mxu0 0.0
        %1300 = vmatpush1.msra.mxu0 0.0
        %1301 = vmatprep.subr.mxu0 0.0
        %1302 = vmatpush1.msra.mxu0 0.0
        %1303 = vmatprep.subr.mxu0 0.0
        %1304 = vmatpush1.msra.mxu0 0.0
        %1305 = vmatprep.subr.mxu0 0.0
        %1306 = vmatpush1.msra.mxu0 0.0
        %1307 = vmatprep.subr.mxu0 0.0
        %1308 = vmatpush1.msra.mxu0 0.0
        %1309 = vmatprep.subr.mxu0 0.0
        %1310 = vmatpush1.msra.mxu0 0.0
        %1311 = vmatprep.mubr.f32.mxu0 0.0
        %1312 = vmatmul.mubr.f32.gmra.mrb[0].mxu0 %v531
        %v1313 = vpop.f32.mrb[0].mxu0
        %v1314 = vadd.f32 0.0, %v1313
        %v1315 = vpop.f32.mrb[0].mxu0
        %1316 = vmatprep.mubr.f32.mxu0 0.0
        %1317 = vmatmul.mubr.f32.gmra.mrb[0].mxu0 %v533
        %v1318 = vpop.f32.mrb[0].mxu0
        %v1319 = vpop.f32.mrb[0].mxu0
        %1320 = vmatprep.mubr.f32.mxu0 0.0
        %1321 = vmatmul.mubr.f32.gmra.mrb[0].mxu0 %v535
        %v1322 = vpop.f32.mrb[0].mxu0
        %v1323 = vadd.f32 0.0, %v1322
        %v1324 = vpop.f32.mrb[0].mxu0
        %1325 = vmatprep.mubr.f32.mxu0 0.0
        %1326 = vmatmul.mubr.f32.gmra.mrb[0].mxu0 %v537
        %v1327 = vpop.f32.mrb[0].mxu0
        %v1328 = vpop.f32.mrb[0].mxu0
        %1329 = vmatprep.mubr.f32.mxu0 0.0
        %1330 = vmatmul.mubr.f32.gmra.mrb[0].mxu0 %v539
        %v1331 = vpop.f32.mrb[0].mxu0
        %v1332 = vadd.f32 0.0, %v1331
        %v1333 = vpop.f32.mrb[0].mxu0
        %1334 = vmatprep.mubr.f32.mxu0 0.0
        %1335 = vmatmul.mubr.f32.gmra.mrb[0].mxu0 %v541
        %v1336 = vpop.f32.mrb[0].mxu0
        %v1337 = vpop.f32.mrb[0].mxu0
        %1338 = vmatprep.mubr.f32.mxu0 0.0
        %1339 = vmatmul.mubr.f32.gmra.mrb[0].mxu0 %v543
        %v1340 = vpop.f32.mrb[0].mxu0
        %v1341 = vadd.f32 0.0, %v1340
        %v1342 = vpop.f32.mrb[0].mxu0
        %1343 = vmatprep.mubr.f32.mxu0 0.0
        %1344 = vmatmul.mubr.f32.gmra.mrb[0].mxu0 %v545
        %v1345 = vpop.f32.mrb[0].mxu0
        %v1346 = vpop.f32.mrb[0].mxu0
        %1347 = vmatprep.mubr.f32.mxu0 0.0
        %1348 = vmatmul.mubr.f32.gmra.mrb[0].mxu0 %v547
        %v1349 = vpop.f32.mrb[0].mxu0
        %v1350 = vadd.f32 0.0, %v1349
        %v1351 = vpop.f32.mrb[0].mxu0
        %1352 = vmatprep.mubr.f32.mxu0 0.0
        %1353 = vmatmul.mubr.f32.gmra.mrb[0].mxu0 %v549
        %v1354 = vpop.f32.mrb[0].mxu0
        %v1355 = vpop.f32.mrb[0].mxu0
        %1356 = vmatprep.mubr.f32.mxu0 0.0
        %1357 = vmatmul.mubr.f32.gmra.mrb[0].mxu0 %v551
        %v1358 = vpop.f32.mrb[0].mxu0
        %v1359 = vadd.f32 0.0, %v1358
        %v1360 = vpop.f32.mrb[0].mxu0
        %1361 = vmatprep.mubr.f32.mxu0 0.0
        %1362 = vmatmul.mubr.f32.gmra.mrb[0].mxu0 %v553
        %v1363 = vpop.f32.mrb[0].mxu0
        %v1364 = vpop.f32.mrb[0].mxu0
        %1365 = vmatprep.mubr.f32.mxu0 0.0
        %1366 = vmatmul.mubr.f32.gmra.mrb[0].mxu0 %v555
        %v1367 = vpop.f32.mrb[0].mxu0
        %v1368 = vadd.f32 0.0, %v1367
        %v1369 = vpop.f32.mrb[0].mxu0
        %1370 = vmatprep.mubr.f32.mxu0 0.0
        %1371 = vmatmul.mubr.f32.gmra.mrb[0].mxu0 %v557
        %v1372 = vpop.f32.mrb[0].mxu0
        %v1373 = vpop.f32.mrb[0].mxu0
        %1374 = vmatprep.mubr.f32.mxu0 0.0
        %1375 = vmatmul.mubr.f32.gmra.mrb[0].mxu0 %v1242
        %v1376 = vpop.f32.mrb[0].mxu0
        %v1377 = vadd.f32 0.0, %v1376
        %v1378 = vpop.f32.mrb[0].mxu0
        %1379 = vmatprep.mubr.f32.mxu0 0.0
        %1380 = vmatmul.mubr.f32.gmra.mrb[0].mxu0 %v1244
        %v1381 = vpop.f32.mrb[0].mxu0
        %v1382 = vpop.f32.mrb[0].mxu0
        %1383 = vdwg.mxu0
        %v1384 = vadd.f32 %v1214, %v1314
        %v1385 = vadd.f32 %v1215, %v1323
        %v1386 = vadd.f32 %v1216, %v1332
        %v1387 = vadd.f32 %v1217, %v1341
        %v1388 = vadd.f32 %v1218, %v1350
        %v1389 = vadd.f32 %v1219, %v1359
        %v1390 = vadd.f32 %v1220, %v1368
        %v1391 = vadd.f32 %v1221, %v1377
        %s1392 = scalar_lea.vmem [#allocation3], 640
        %v1393 = vld [vmem:[%s1392] sm:$0xff]
        %v1394 = vld [vmem:[%s1392 + $0x8] sm:$0xff]
        %v1395 = vld [vmem:[%s1392 + $0x10] sm:$0xff]
        %v1396 = vld [vmem:[%s1392 + $0x18] sm:$0xff]
        %v1397 = vld [vmem:[%s1392 + $0x20] sm:$0xff]
        %v1398 = vld [vmem:[%s1392 + $0x28] sm:$0xff]
        %v1399 = vld [vmem:[%s1392 + $0x30] sm:$0xff]
        %v1400 = vld [vmem:[%s1392 + $0x38] sm:$0xff]
        %v1401 = vld [vmem:[%s1392 + $0x40] sm:$0xff]
        %v1402 = vld [vmem:[%s1392 + $0x48] sm:$0xff]
        %v1403 = vld [vmem:[%s1392 + $0x50] sm:$0xff]
        %v1404 = vld [vmem:[%s1392 + $0x58] sm:$0xff]
        %v1405 = vld [vmem:[%s1392 + $0x60] sm:$0xff]
        %v1406 = vld [vmem:[%s1392 + $0x68] sm:$0xff]
        %v1407 = vld [vmem:[%s1392 + $0x70] sm:$0xff]
        %v1408 = vld [vmem:[%s1392 + $0x78] sm:$0xff]
        %v1409 = vrot.slane %v469, 2
        %v1410 = vsel %vm865, %v897, %v1409
        %v1411 = vrot.slane %v470, 2
        %v1412 = vsel %vm865, %v1409, %v1411
        %1415 = vmatprep.subr.mxu0 0.0
        %1416 = vmatpush1.msra.mxu0 %v1393
        %1417 = vmatprep.subr.mxu0 0.0
        %1418 = vmatpush1.msra.mxu0 %v1394
        %1419 = vmatprep.subr.mxu0 0.0
        %1420 = vmatpush1.msra.mxu0 %v1395
        %1421 = vmatprep.subr.mxu0 0.0
        %1422 = vmatpush1.msra.mxu0 %v1396
        %1423 = vmatprep.subr.mxu0 0.0
        %1424 = vmatpush1.msra.mxu0 %v1397
        %1425 = vmatprep.subr.mxu0 0.0
        %1426 = vmatpush1.msra.mxu0 %v1398
        %1427 = vmatprep.subr.mxu0 0.0
        %1428 = vmatpush1.msra.mxu0 %v1399
        %1429 = vmatprep.subr.mxu0 0.0
        %1430 = vmatpush1.msra.mxu0 %v1400
        %1431 = vmatprep.subr.mxu0 0.0
        %1432 = vmatpush1.msra.mxu0 %v1401
        %1433 = vmatprep.subr.mxu0 0.0
        %1434 = vmatpush1.msra.mxu0 %v1402
        %1435 = vmatprep.subr.mxu0 0.0
        %1436 = vmatpush1.msra.mxu0 %v1403
        %1437 = vmatprep.subr.mxu0 0.0
        %1438 = vmatpush1.msra.mxu0 %v1404
        %1439 = vmatprep.subr.mxu0 0.0
        %1440 = vmatpush1.msra.mxu0 %v1405
        %1441 = vmatprep.subr.mxu0 0.0
        %1442 = vmatpush1.msra.mxu0 %v1406
        %1443 = vmatprep.subr.mxu0 0.0
        %1444 = vmatpush1.msra.mxu0 %v1407
        %1445 = vmatprep.subr.mxu0 0.0
        %1446 = vmatpush1.msra.mxu0 %v1408
        %1447 = vmatprep.subr.mxu0 0.0
        %1448 = vmatpush1.msra.mxu0 0.0
        %1449 = vmatprep.subr.mxu0 0.0
        %1450 = vmatpush1.msra.mxu0 0.0
        %1451 = vmatprep.subr.mxu0 0.0
        %1452 = vmatpush1.msra.mxu0 0.0
        %1453 = vmatprep.subr.mxu0 0.0
        %1454 = vmatpush1.msra.mxu0 0.0
        %1455 = vmatprep.subr.mxu0 0.0
        %1456 = vmatpush1.msra.mxu0 0.0
        %1457 = vmatprep.subr.mxu0 0.0
        %1458 = vmatpush1.msra.mxu0 0.0
        %1459 = vmatprep.subr.mxu0 0.0
        %1460 = vmatpush1.msra.mxu0 0.0
        %1461 = vmatprep.subr.mxu0 0.0
        %1462 = vmatpush1.msra.mxu0 0.0
        %1463 = vmatprep.subr.mxu0 0.0
        %1464 = vmatpush1.msra.mxu0 0.0
        %1465 = vmatprep.subr.mxu0 0.0
        %1466 = vmatpush1.msra.mxu0 0.0
        %1467 = vmatprep.subr.mxu0 0.0
        %1468 = vmatpush1.msra.mxu0 0.0
        %1469 = vmatprep.subr.mxu0 0.0
        %1470 = vmatpush1.msra.mxu0 0.0
        %1471 = vmatprep.subr.mxu0 0.0
        %1472 = vmatpush1.msra.mxu0 0.0
        %1473 = vmatprep.subr.mxu0 0.0
        %1474 = vmatpush1.msra.mxu0 0.0
        %1475 = vmatprep.subr.mxu0 0.0
        %1476 = vmatpush1.msra.mxu0 0.0
        %1477 = vmatprep.subr.mxu0 0.0
        %1478 = vmatpush1.msra.mxu0 0.0
        %1479 = vmatprep.mubr.f32.mxu0 0.0
        %1480 = vmatmul.mubr.f32.gmra.mrb[0].mxu0 %v872
        %v1481 = vpop.f32.mrb[0].mxu0
        %v1482 = vadd.f32 0.0, %v1481
        %v1483 = vpop.f32.mrb[0].mxu0
        %1484 = vmatprep.mubr.f32.mxu0 0.0
        %1485 = vmatmul.mubr.f32.gmra.mrb[0].mxu0 %v874
        %v1486 = vpop.f32.mrb[0].mxu0
        %v1487 = vpop.f32.mrb[0].mxu0
        %1488 = vmatprep.mubr.f32.mxu0 0.0
        %1489 = vmatmul.mubr.f32.gmra.mrb[0].mxu0 %v876
        %v1490 = vpop.f32.mrb[0].mxu0
        %v1491 = vadd.f32 0.0, %v1490
        %v1492 = vpop.f32.mrb[0].mxu0
        %1493 = vmatprep.mubr.f32.mxu0 0.0
        %1494 = vmatmul.mubr.f32.gmra.mrb[0].mxu0 %v878
        %v1495 = vpop.f32.mrb[0].mxu0
        %v1496 = vpop.f32.mrb[0].mxu0
        %1497 = vmatprep.mubr.f32.mxu0 0.0
        %1498 = vmatmul.mubr.f32.gmra.mrb[0].mxu0 %v880
        %v1499 = vpop.f32.mrb[0].mxu0
        %v1500 = vadd.f32 0.0, %v1499
        %v1501 = vpop.f32.mrb[0].mxu0
        %1502 = vmatprep.mubr.f32.mxu0 0.0
        %1503 = vmatmul.mubr.f32.gmra.mrb[0].mxu0 %v882
        %v1504 = vpop.f32.mrb[0].mxu0
        %v1505 = vpop.f32.mrb[0].mxu0
        %1506 = vmatprep.mubr.f32.mxu0 0.0
        %1507 = vmatmul.mubr.f32.gmra.mrb[0].mxu0 %v884
        %v1508 = vpop.f32.mrb[0].mxu0
        %v1509 = vadd.f32 0.0, %v1508
        %v1510 = vpop.f32.mrb[0].mxu0
        %1511 = vmatprep.mubr.f32.mxu0 0.0
        %1512 = vmatmul.mubr.f32.gmra.mrb[0].mxu0 %v886
        %v1513 = vpop.f32.mrb[0].mxu0
        %v1514 = vpop.f32.mrb[0].mxu0
        %1515 = vmatprep.mubr.f32.mxu0 0.0
        %1516 = vmatmul.mubr.f32.gmra.mrb[0].mxu0 %v888
        %v1517 = vpop.f32.mrb[0].mxu0
        %v1518 = vadd.f32 0.0, %v1517
        %v1519 = vpop.f32.mrb[0].mxu0
        %1520 = vmatprep.mubr.f32.mxu0 0.0
        %1521 = vmatmul.mubr.f32.gmra.mrb[0].mxu0 %v890
        %v1522 = vpop.f32.mrb[0].mxu0
        %v1523 = vpop.f32.mrb[0].mxu0
        %1524 = vmatprep.mubr.f32.mxu0 0.0
        %1525 = vmatmul.mubr.f32.gmra.mrb[0].mxu0 %v892
        %v1526 = vpop.f32.mrb[0].mxu0
        %v1527 = vadd.f32 0.0, %v1526
        %v1528 = vpop.f32.mrb[0].mxu0
        %1529 = vmatprep.mubr.f32.mxu0 0.0
        %1530 = vmatmul.mubr.f32.gmra.mrb[0].mxu0 %v894
        %v1531 = vpop.f32.mrb[0].mxu0
        %v1532 = vpop.f32.mrb[0].mxu0
        %1533 = vmatprep.mubr.f32.mxu0 0.0
        %1534 = vmatmul.mubr.f32.gmra.mrb[0].mxu0 %v896
        %v1535 = vpop.f32.mrb[0].mxu0
        %v1536 = vadd.f32 0.0, %v1535
        %v1537 = vpop.f32.mrb[0].mxu0
        %1538 = vmatprep.mubr.f32.mxu0 0.0
        %1539 = vmatmul.mubr.f32.gmra.mrb[0].mxu0 %v898
        %v1540 = vpop.f32.mrb[0].mxu0
        %v1541 = vpop.f32.mrb[0].mxu0
        %1542 = vmatprep.mubr.f32.mxu0 0.0
        %1543 = vmatmul.mubr.f32.gmra.mrb[0].mxu0 %v1410
        %v1544 = vpop.f32.mrb[0].mxu0
        %v1545 = vadd.f32 0.0, %v1544
        %v1546 = vpop.f32.mrb[0].mxu0
        %1547 = vmatprep.mubr.f32.mxu0 0.0
        %1548 = vmatmul.mubr.f32.gmra.mrb[0].mxu0 %v1412
        %v1549 = vpop.f32.mrb[0].mxu0
        %v1550 = vpop.f32.mrb[0].mxu0
        %1551 = vdwg.mxu0
        %v1552 = vadd.f32 %v1384, %v1482
        %v1553 = vadd.f32 %v1385, %v1491
        %v1554 = vadd.f32 %v1386, %v1500
        %v1555 = vadd.f32 %v1387, %v1509
        %v1556 = vadd.f32 %v1388, %v1518
        %v1557 = vadd.f32 %v1389, %v1527
        %v1558 = vadd.f32 %v1390, %v1536
        %v1559 = vadd.f32 %v1391, %v1545
        %s1560 = scalar_lea.vmem [#allocation3], 768
        %v1561 = vld [vmem:[%s1560] sm:$0xff]
        %v1562 = vld [vmem:[%s1560 + $0x8] sm:$0xff]
        %v1563 = vld [vmem:[%s1560 + $0x10] sm:$0xff]
        %v1564 = vld [vmem:[%s1560 + $0x18] sm:$0xff]
        %v1565 = vld [vmem:[%s1560 + $0x20] sm:$0xff]
        %v1566 = vld [vmem:[%s1560 + $0x28] sm:$0xff]
        %v1567 = vld [vmem:[%s1560 + $0x30] sm:$0xff]
        %v1568 = vld [vmem:[%s1560 + $0x38] sm:$0xff]
        %v1569 = vld [vmem:[%s1560 + $0x40] sm:$0xff]
        %v1570 = vld [vmem:[%s1560 + $0x48] sm:$0xff]
        %v1571 = vld [vmem:[%s1560 + $0x50] sm:$0xff]
        %v1572 = vld [vmem:[%s1560 + $0x58] sm:$0xff]
        %v1573 = vld [vmem:[%s1560 + $0x60] sm:$0xff]
        %v1574 = vld [vmem:[%s1560 + $0x68] sm:$0xff]
        %v1575 = vld [vmem:[%s1560 + $0x70] sm:$0xff]
        %v1576 = vld [vmem:[%s1560 + $0x78] sm:$0xff]
        %1577 = vmatprep.subr.mxu0 0.0
        %1578 = vmatpush1.msra.mxu0 %v1561
        %1579 = vmatprep.subr.mxu0 0.0
        %1580 = vmatpush1.msra.mxu0 %v1562
        %1581 = vmatprep.subr.mxu0 0.0
        %1582 = vmatpush1.msra.mxu0 %v1563
        %1583 = vmatprep.subr.mxu0 0.0
        %1584 = vmatpush1.msra.mxu0 %v1564
        %1585 = vmatprep.subr.mxu0 0.0
        %1586 = vmatpush1.msra.mxu0 %v1565
        %1587 = vmatprep.subr.mxu0 0.0
        %1588 = vmatpush1.msra.mxu0 %v1566
        %1589 = vmatprep.subr.mxu0 0.0
        %1590 = vmatpush1.msra.mxu0 %v1567
        %1591 = vmatprep.subr.mxu0 0.0
        %1592 = vmatpush1.msra.mxu0 %v1568
        %1593 = vmatprep.subr.mxu0 0.0
        %1594 = vmatpush1.msra.mxu0 %v1569
        %1595 = vmatprep.subr.mxu0 0.0
        %1596 = vmatpush1.msra.mxu0 %v1570
        %1597 = vmatprep.subr.mxu0 0.0
        %1598 = vmatpush1.msra.mxu0 %v1571
        %1599 = vmatprep.subr.mxu0 0.0
        %1600 = vmatpush1.msra.mxu0 %v1572
        %1601 = vmatprep.subr.mxu0 0.0
        %1602 = vmatpush1.msra.mxu0 %v1573
        %1603 = vmatprep.subr.mxu0 0.0
        %1604 = vmatpush1.msra.mxu0 %v1574
        %1605 = vmatprep.subr.mxu0 0.0
        %1606 = vmatpush1.msra.mxu0 %v1575
        %1607 = vmatprep.subr.mxu0 0.0
        %1608 = vmatpush1.msra.mxu0 %v1576
        %1609 = vmatprep.subr.mxu0 0.0
        %1610 = vmatpush1.msra.mxu0 0.0
        %1611 = vmatprep.subr.mxu0 0.0
        %1612 = vmatpush1.msra.mxu0 0.0
        %1613 = vmatprep.subr.mxu0 0.0
        %1614 = vmatpush1.msra.mxu0 0.0
        %1615 = vmatprep.subr.mxu0 0.0
        %1616 = vmatpush1.msra.mxu0 0.0
        %1617 = vmatprep.subr.mxu0 0.0
        %1618 = vmatpush1.msra.mxu0 0.0
        %1619 = vmatprep.subr.mxu0 0.0
        %1620 = vmatpush1.msra.mxu0 0.0
        %1621 = vmatprep.subr.mxu0 0.0
        %1622 = vmatpush1.msra.mxu0 0.0
        %1623 = vmatprep.subr.mxu0 0.0
        %1624 = vmatpush1.msra.mxu0 0.0
        %1625 = vmatprep.subr.mxu0 0.0
        %1626 = vmatpush1.msra.mxu0 0.0
        %1627 = vmatprep.subr.mxu0 0.0
        %1628 = vmatpush1.msra.mxu0 0.0
        %1629 = vmatprep.subr.mxu0 0.0
        %1630 = vmatpush1.msra.mxu0 0.0
        %1631 = vmatprep.subr.mxu0 0.0
        %1632 = vmatpush1.msra.mxu0 0.0
        %1633 = vmatprep.subr.mxu0 0.0
        %1634 = vmatpush1.msra.mxu0 0.0
        %1635 = vmatprep.subr.mxu0 0.0
        %1636 = vmatpush1.msra.mxu0 0.0
        %1637 = vmatprep.subr.mxu0 0.0
        %1638 = vmatpush1.msra.mxu0 0.0
        %1639 = vmatprep.subr.mxu0 0.0
        %1640 = vmatpush1.msra.mxu0 0.0
        %1641 = vmatprep.mubr.f32.mxu0 0.0
        %1642 = vmatmul.mubr.f32.gmra.mrb[0].mxu0 %v456
        %v1643 = vpop.f32.mrb[0].mxu0
        %v1644 = vadd.f32 0.0, %v1643
        %v1645 = vpop.f32.mrb[0].mxu0
        %1646 = vmatprep.mubr.f32.mxu0 0.0
        %1647 = vmatmul.mubr.f32.gmra.mrb[0].mxu0 %v457
        %v1648 = vpop.f32.mrb[0].mxu0
        %v1649 = vpop.f32.mrb[0].mxu0
        %1650 = vmatprep.mubr.f32.mxu0 0.0
        %1651 = vmatmul.mubr.f32.gmra.mrb[0].mxu0 %v458
        %v1652 = vpop.f32.mrb[0].mxu0
        %v1653 = vadd.f32 0.0, %v1652
        %v1654 = vpop.f32.mrb[0].mxu0
        %1655 = vmatprep.mubr.f32.mxu0 0.0
        %1656 = vmatmul.mubr.f32.gmra.mrb[0].mxu0 %v459
        %v1657 = vpop.f32.mrb[0].mxu0
        %v1658 = vpop.f32.mrb[0].mxu0
        %1659 = vmatprep.mubr.f32.mxu0 0.0
        %1660 = vmatmul.mubr.f32.gmra.mrb[0].mxu0 %v460
        %v1661 = vpop.f32.mrb[0].mxu0
        %v1662 = vadd.f32 0.0, %v1661
        %v1663 = vpop.f32.mrb[0].mxu0
        %1664 = vmatprep.mubr.f32.mxu0 0.0
        %1665 = vmatmul.mubr.f32.gmra.mrb[0].mxu0 %v461
        %v1666 = vpop.f32.mrb[0].mxu0
        %v1667 = vpop.f32.mrb[0].mxu0
        %1668 = vmatprep.mubr.f32.mxu0 0.0
        %1669 = vmatmul.mubr.f32.gmra.mrb[0].mxu0 %v462
        %v1670 = vpop.f32.mrb[0].mxu0
        %v1671 = vadd.f32 0.0, %v1670
        %v1672 = vpop.f32.mrb[0].mxu0
        %1673 = vmatprep.mubr.f32.mxu0 0.0
        %1674 = vmatmul.mubr.f32.gmra.mrb[0].mxu0 %v463
        %v1675 = vpop.f32.mrb[0].mxu0
        %v1676 = vpop.f32.mrb[0].mxu0
        %1677 = vmatprep.mubr.f32.mxu0 0.0
        %1678 = vmatmul.mubr.f32.gmra.mrb[0].mxu0 %v464
        %v1679 = vpop.f32.mrb[0].mxu0
        %v1680 = vadd.f32 0.0, %v1679
        %v1681 = vpop.f32.mrb[0].mxu0
        %1682 = vmatprep.mubr.f32.mxu0 0.0
        %1683 = vmatmul.mubr.f32.gmra.mrb[0].mxu0 %v465
        %v1684 = vpop.f32.mrb[0].mxu0
        %v1685 = vpop.f32.mrb[0].mxu0
        %1686 = vmatprep.mubr.f32.mxu0 0.0
        %1687 = vmatmul.mubr.f32.gmra.mrb[0].mxu0 %v466
        %v1688 = vpop.f32.mrb[0].mxu0
        %v1689 = vadd.f32 0.0, %v1688
        %v1690 = vpop.f32.mrb[0].mxu0
        %1691 = vmatprep.mubr.f32.mxu0 0.0
        %1692 = vmatmul.mubr.f32.gmra.mrb[0].mxu0 %v467
        %v1693 = vpop.f32.mrb[0].mxu0
        %v1694 = vpop.f32.mrb[0].mxu0
        %1695 = vmatprep.mubr.f32.mxu0 0.0
        %1696 = vmatmul.mubr.f32.gmra.mrb[0].mxu0 %v468
        %v1697 = vpop.f32.mrb[0].mxu0
        %v1698 = vadd.f32 0.0, %v1697
        %v1699 = vpop.f32.mrb[0].mxu0
        %1700 = vmatprep.mubr.f32.mxu0 0.0
        %1701 = vmatmul.mubr.f32.gmra.mrb[0].mxu0 %v469
        %v1702 = vpop.f32.mrb[0].mxu0
        %v1703 = vpop.f32.mrb[0].mxu0
        %1704 = vmatprep.mubr.f32.mxu0 0.0
        %1705 = vmatmul.mubr.f32.gmra.mrb[0].mxu0 %v470
        %v1706 = vpop.f32.mrb[0].mxu0
        %v1707 = vadd.f32 0.0, %v1706
        %v1708 = vpop.f32.mrb[0].mxu0
        %1709 = vmatprep.mubr.f32.mxu0 0.0
        %1710 = vmatmul.mubr.f32.gmra.mrb[0].mxu0 %v471
        %v1711 = vpop.f32.mrb[0].mxu0
        %v1712 = vpop.f32.mrb[0].mxu0
        %1713 = vdwg.mxu0
        %v1714 = vadd.f32 %v1552, %v1644
        %v1715 = vadd.f32 %v1553, %v1653
        %v1716 = vadd.f32 %v1554, %v1662
        %v1717 = vadd.f32 %v1555, %v1671
        %v1718 = vadd.f32 %v1556, %v1680
        %v1719 = vadd.f32 %v1557, %v1689
        %v1720 = vadd.f32 %v1558, %v1698
        %v1721 = vadd.f32 %v1559, %v1707
        %s1722 = scalar_lea.vmem [#allocation3], 896
        %v1723 = vld [vmem:[%s1722] sm:$0xff]
        %v1724 = vld [vmem:[%s1722 + $0x8] sm:$0xff]
        %v1725 = vld [vmem:[%s1722 + $0x10] sm:$0xff]
        %v1726 = vld [vmem:[%s1722 + $0x18] sm:$0xff]
        %v1727 = vld [vmem:[%s1722 + $0x20] sm:$0xff]
        %v1728 = vld [vmem:[%s1722 + $0x28] sm:$0xff]
        %v1729 = vld [vmem:[%s1722 + $0x30] sm:$0xff]
        %v1730 = vld [vmem:[%s1722 + $0x38] sm:$0xff]
        %v1731 = vld [vmem:[%s1722 + $0x40] sm:$0xff]
        %v1732 = vld [vmem:[%s1722 + $0x48] sm:$0xff]
        %v1733 = vld [vmem:[%s1722 + $0x50] sm:$0xff]
        %v1734 = vld [vmem:[%s1722 + $0x58] sm:$0xff]
        %v1735 = vld [vmem:[%s1722 + $0x60] sm:$0xff]
        %v1736 = vld [vmem:[%s1722 + $0x68] sm:$0xff]
        %v1737 = vld [vmem:[%s1722 + $0x70] sm:$0xff]
        %v1738 = vld [vmem:[%s1722 + $0x78] sm:$0xff]
        %v1741 = vrot.slane %v471, 1
        %v1742 = vsel %vm524, %v1243, %v1741
        %v1743 = vrot.slane %v472, 1
        %v1744 = vsel %vm524, %v1741, %v1743
        %1747 = vmatprep.subr.mxu0 0.0
        %1748 = vmatpush1.msra.mxu0 %v1723
        %1749 = vmatprep.subr.mxu0 0.0
        %1750 = vmatpush1.msra.mxu0 %v1724
        %1751 = vmatprep.subr.mxu0 0.0
        %1752 = vmatpush1.msra.mxu0 %v1725
        %1753 = vmatprep.subr.mxu0 0.0
        %1754 = vmatpush1.msra.mxu0 %v1726
        %1755 = vmatprep.subr.mxu0 0.0
        %1756 = vmatpush1.msra.mxu0 %v1727
        %1757 = vmatprep.subr.mxu0 0.0
        %1758 = vmatpush1.msra.mxu0 %v1728
        %1759 = vmatprep.subr.mxu0 0.0
        %1760 = vmatpush1.msra.mxu0 %v1729
        %1761 = vmatprep.subr.mxu0 0.0
        %1762 = vmatpush1.msra.mxu0 %v1730
        %1763 = vmatprep.subr.mxu0 0.0
        %1764 = vmatpush1.msra.mxu0 %v1731
        %1765 = vmatprep.subr.mxu0 0.0
        %1766 = vmatpush1.msra.mxu0 %v1732
        %1767 = vmatprep.subr.mxu0 0.0
        %1768 = vmatpush1.msra.mxu0 %v1733
        %1769 = vmatprep.subr.mxu0 0.0
        %1770 = vmatpush1.msra.mxu0 %v1734
        %1771 = vmatprep.subr.mxu0 0.0
        %1772 = vmatpush1.msra.mxu0 %v1735
        %1773 = vmatprep.subr.mxu0 0.0
        %1774 = vmatpush1.msra.mxu0 %v1736
        %1775 = vmatprep.subr.mxu0 0.0
        %1776 = vmatpush1.msra.mxu0 %v1737
        %1777 = vmatprep.subr.mxu0 0.0
        %1778 = vmatpush1.msra.mxu0 %v1738
        %1779 = vmatprep.subr.mxu0 0.0
        %1780 = vmatpush1.msra.mxu0 0.0
        %1781 = vmatprep.subr.mxu0 0.0
        %1782 = vmatpush1.msra.mxu0 0.0
        %1783 = vmatprep.subr.mxu0 0.0
        %1784 = vmatpush1.msra.mxu0 0.0
        %1785 = vmatprep.subr.mxu0 0.0
        %1786 = vmatpush1.msra.mxu0 0.0
        %1787 = vmatprep.subr.mxu0 0.0
        %1788 = vmatpush1.msra.mxu0 0.0
        %1789 = vmatprep.subr.mxu0 0.0
        %1790 = vmatpush1.msra.mxu0 0.0
        %1791 = vmatprep.subr.mxu0 0.0
        %1792 = vmatpush1.msra.mxu0 0.0
        %1793 = vmatprep.subr.mxu0 0.0
        %1794 = vmatpush1.msra.mxu0 0.0
        %1795 = vmatprep.subr.mxu0 0.0
        %1796 = vmatpush1.msra.mxu0 0.0
        %1797 = vmatprep.subr.mxu0 0.0
        %1798 = vmatpush1.msra.mxu0 0.0
        %1799 = vmatprep.subr.mxu0 0.0
        %1800 = vmatpush1.msra.mxu0 0.0
        %1801 = vmatprep.subr.mxu0 0.0
        %1802 = vmatpush1.msra.mxu0 0.0
        %1803 = vmatprep.subr.mxu0 0.0
        %1804 = vmatpush1.msra.mxu0 0.0
        %1805 = vmatprep.subr.mxu0 0.0
        %1806 = vmatpush1.msra.mxu0 0.0
        %1807 = vmatprep.subr.mxu0 0.0
        %1808 = vmatpush1.msra.mxu0 0.0
        %1809 = vmatprep.subr.mxu0 0.0
        %1810 = vmatpush1.msra.mxu0 0.0
        %1811 = vmatprep.mubr.f32.mxu0 0.0
        %1812 = vmatmul.mubr.f32.gmra.mrb[0].mxu0 %v535
        %v1813 = vpop.f32.mrb[0].mxu0
        %v1814 = vadd.f32 0.0, %v1813
        %v1815 = vpop.f32.mrb[0].mxu0
        %1816 = vmatprep.mubr.f32.mxu0 0.0
        %1817 = vmatmul.mubr.f32.gmra.mrb[0].mxu0 %v537
        %v1818 = vpop.f32.mrb[0].mxu0
        %v1819 = vpop.f32.mrb[0].mxu0
        %1820 = vmatprep.mubr.f32.mxu0 0.0
        %1821 = vmatmul.mubr.f32.gmra.mrb[0].mxu0 %v539
        %v1822 = vpop.f32.mrb[0].mxu0
        %v1823 = vadd.f32 0.0, %v1822
        %v1824 = vpop.f32.mrb[0].mxu0
        %1825 = vmatprep.mubr.f32.mxu0 0.0
        %1826 = vmatmul.mubr.f32.gmra.mrb[0].mxu0 %v541
        %v1827 = vpop.f32.mrb[0].mxu0
        %v1828 = vpop.f32.mrb[0].mxu0
        %1829 = vmatprep.mubr.f32.mxu0 0.0
        %1830 = vmatmul.mubr.f32.gmra.mrb[0].mxu0 %v543
        %v1831 = vpop.f32.mrb[0].mxu0
        %v1832 = vadd.f32 0.0, %v1831
        %v1833 = vpop.f32.mrb[0].mxu0
        %1834 = vmatprep.mubr.f32.mxu0 0.0
        %1835 = vmatmul.mubr.f32.gmra.mrb[0].mxu0 %v545
        %v1836 = vpop.f32.mrb[0].mxu0
        %v1837 = vpop.f32.mrb[0].mxu0
        %1838 = vmatprep.mubr.f32.mxu0 0.0
        %1839 = vmatmul.mubr.f32.gmra.mrb[0].mxu0 %v547
        %v1840 = vpop.f32.mrb[0].mxu0
        %v1841 = vadd.f32 0.0, %v1840
        %v1842 = vpop.f32.mrb[0].mxu0
        %1843 = vmatprep.mubr.f32.mxu0 0.0
        %1844 = vmatmul.mubr.f32.gmra.mrb[0].mxu0 %v549
        %v1845 = vpop.f32.mrb[0].mxu0
        %v1846 = vpop.f32.mrb[0].mxu0
        %1847 = vmatprep.mubr.f32.mxu0 0.0
        %1848 = vmatmul.mubr.f32.gmra.mrb[0].mxu0 %v551
        %v1849 = vpop.f32.mrb[0].mxu0
        %v1850 = vadd.f32 0.0, %v1849
        %v1851 = vpop.f32.mrb[0].mxu0
        %1852 = vmatprep.mubr.f32.mxu0 0.0
        %1853 = vmatmul.mubr.f32.gmra.mrb[0].mxu0 %v553
        %v1854 = vpop.f32.mrb[0].mxu0
        %v1855 = vpop.f32.mrb[0].mxu0
        %1856 = vmatprep.mubr.f32.mxu0 0.0
        %1857 = vmatmul.mubr.f32.gmra.mrb[0].mxu0 %v555
        %v1858 = vpop.f32.mrb[0].mxu0
        %v1859 = vadd.f32 0.0, %v1858
        %v1860 = vpop.f32.mrb[0].mxu0
        %1861 = vmatprep.mubr.f32.mxu0 0.0
        %1862 = vmatmul.mubr.f32.gmra.mrb[0].mxu0 %v557
        %v1863 = vpop.f32.mrb[0].mxu0
        %v1864 = vpop.f32.mrb[0].mxu0
        %1865 = vmatprep.mubr.f32.mxu0 0.0
        %1866 = vmatmul.mubr.f32.gmra.mrb[0].mxu0 %v1242
        %v1867 = vpop.f32.mrb[0].mxu0
        %v1868 = vadd.f32 0.0, %v1867
        %v1869 = vpop.f32.mrb[0].mxu0
        %1870 = vmatprep.mubr.f32.mxu0 0.0
        %1871 = vmatmul.mubr.f32.gmra.mrb[0].mxu0 %v1244
        %v1872 = vpop.f32.mrb[0].mxu0
        %v1873 = vpop.f32.mrb[0].mxu0
        %1874 = vmatprep.mubr.f32.mxu0 0.0
        %1875 = vmatmul.mubr.f32.gmra.mrb[0].mxu0 %v1742
        %v1876 = vpop.f32.mrb[0].mxu0
        %v1877 = vadd.f32 0.0, %v1876
        %v1878 = vpop.f32.mrb[0].mxu0
        %1879 = vmatprep.mubr.f32.mxu0 0.0
        %1880 = vmatmul.mubr.f32.gmra.mrb[0].mxu0 %v1744
        %v1881 = vpop.f32.mrb[0].mxu0
        %v1882 = vpop.f32.mrb[0].mxu0
        %1883 = vdwg.mxu0
        %v1884 = vadd.f32 %v1714, %v1814
        %v1885 = vadd.f32 %v1715, %v1823
        %v1886 = vadd.f32 %v1716, %v1832
        %v1887 = vadd.f32 %v1717, %v1841
        %v1888 = vadd.f32 %v1718, %v1850
        %v1889 = vadd.f32 %v1719, %v1859
        %v1890 = vadd.f32 %v1720, %v1868
        %v1891 = vadd.f32 %v1721, %v1877
        %s1892 = scalar_lea.vmem [#allocation3], 1024
        %v1893 = vld [vmem:[%s1892] sm:$0xff]
        %v1894 = vld [vmem:[%s1892 + $0x8] sm:$0xff]
        %v1895 = vld [vmem:[%s1892 + $0x10] sm:$0xff]
        %v1896 = vld [vmem:[%s1892 + $0x18] sm:$0xff]
        %v1897 = vld [vmem:[%s1892 + $0x20] sm:$0xff]
        %v1898 = vld [vmem:[%s1892 + $0x28] sm:$0xff]
        %v1899 = vld [vmem:[%s1892 + $0x30] sm:$0xff]
        %v1900 = vld [vmem:[%s1892 + $0x38] sm:$0xff]
        %v1901 = vld [vmem:[%s1892 + $0x40] sm:$0xff]
        %v1902 = vld [vmem:[%s1892 + $0x48] sm:$0xff]
        %v1903 = vld [vmem:[%s1892 + $0x50] sm:$0xff]
        %v1904 = vld [vmem:[%s1892 + $0x58] sm:$0xff]
        %v1905 = vld [vmem:[%s1892 + $0x60] sm:$0xff]
        %v1906 = vld [vmem:[%s1892 + $0x68] sm:$0xff]
        %v1907 = vld [vmem:[%s1892 + $0x70] sm:$0xff]
        %v1908 = vld [vmem:[%s1892 + $0x78] sm:$0xff]
        %v1909 = vrot.slane %v471, 2
        %v1910 = vsel %vm865, %v1411, %v1909
        %v1911 = vrot.slane %v472, 2
        %v1912 = vsel %vm865, %v1909, %v1911
        %1915 = vmatprep.subr.mxu0 0.0
        %1916 = vmatpush1.msra.mxu0 %v1893
        %1917 = vmatprep.subr.mxu0 0.0
        %1918 = vmatpush1.msra.mxu0 %v1894
        %1919 = vmatprep.subr.mxu0 0.0
        %1920 = vmatpush1.msra.mxu0 %v1895
        %1921 = vmatprep.subr.mxu0 0.0
        %1922 = vmatpush1.msra.mxu0 %v1896
        %1923 = vmatprep.subr.mxu0 0.0
        %1924 = vmatpush1.msra.mxu0 %v1897
        %1925 = vmatprep.subr.mxu0 0.0
        %1926 = vmatpush1.msra.mxu0 %v1898
        %1927 = vmatprep.subr.mxu0 0.0
        %1928 = vmatpush1.msra.mxu0 %v1899
        %1929 = vmatprep.subr.mxu0 0.0
        %1930 = vmatpush1.msra.mxu0 %v1900
        %1931 = vmatprep.subr.mxu0 0.0
        %1932 = vmatpush1.msra.mxu0 %v1901
        %1933 = vmatprep.subr.mxu0 0.0
        %1934 = vmatpush1.msra.mxu0 %v1902
        %1935 = vmatprep.subr.mxu0 0.0
        %1936 = vmatpush1.msra.mxu0 %v1903
        %1937 = vmatprep.subr.mxu0 0.0
        %1938 = vmatpush1.msra.mxu0 %v1904
        %1939 = vmatprep.subr.mxu0 0.0
        %1940 = vmatpush1.msra.mxu0 %v1905
        %1941 = vmatprep.subr.mxu0 0.0
        %1942 = vmatpush1.msra.mxu0 %v1906
        %1943 = vmatprep.subr.mxu0 0.0
        %1944 = vmatpush1.msra.mxu0 %v1907
        %1945 = vmatprep.subr.mxu0 0.0
        %1946 = vmatpush1.msra.mxu0 %v1908
        %1947 = vmatprep.subr.mxu0 0.0
        %1948 = vmatpush1.msra.mxu0 0.0
        %1949 = vmatprep.subr.mxu0 0.0
        %1950 = vmatpush1.msra.mxu0 0.0
        %1951 = vmatprep.subr.mxu0 0.0
        %1952 = vmatpush1.msra.mxu0 0.0
        %1953 = vmatprep.subr.mxu0 0.0
        %1954 = vmatpush1.msra.mxu0 0.0
        %1955 = vmatprep.subr.mxu0 0.0
        %1956 = vmatpush1.msra.mxu0 0.0
        %1957 = vmatprep.subr.mxu0 0.0
        %1958 = vmatpush1.msra.mxu0 0.0
        %1959 = vmatprep.subr.mxu0 0.0
        %1960 = vmatpush1.msra.mxu0 0.0
        %1961 = vmatprep.subr.mxu0 0.0
        %1962 = vmatpush1.msra.mxu0 0.0
        %1963 = vmatprep.subr.mxu0 0.0
        %1964 = vmatpush1.msra.mxu0 0.0
        %1965 = vmatprep.subr.mxu0 0.0
        %1966 = vmatpush1.msra.mxu0 0.0
        %1967 = vmatprep.subr.mxu0 0.0
        %1968 = vmatpush1.msra.mxu0 0.0
        %1969 = vmatprep.subr.mxu0 0.0
        %1970 = vmatpush1.msra.mxu0 0.0
        %1971 = vmatprep.subr.mxu0 0.0
        %1972 = vmatpush1.msra.mxu0 0.0
        %1973 = vmatprep.subr.mxu0 0.0
        %1974 = vmatpush1.msra.mxu0 0.0
        %1975 = vmatprep.subr.mxu0 0.0
        %1976 = vmatpush1.msra.mxu0 0.0
        %1977 = vmatprep.subr.mxu0 0.0
        %1978 = vmatpush1.msra.mxu0 0.0
        %1979 = vmatprep.mubr.f32.mxu0 0.0
        %1980 = vmatmul.mubr.f32.gmra.mrb[0].mxu0 %v876
        %v1981 = vpop.f32.mrb[0].mxu0
        %v1982 = vadd.f32 0.0, %v1981
        %v1983 = vpop.f32.mrb[0].mxu0
        %1984 = vmatprep.mubr.f32.mxu0 0.0
        %1985 = vmatmul.mubr.f32.gmra.mrb[0].mxu0 %v878
        %v1986 = vpop.f32.mrb[0].mxu0
        %v1987 = vpop.f32.mrb[0].mxu0
        %1988 = vmatprep.mubr.f32.mxu0 0.0
        %1989 = vmatmul.mubr.f32.gmra.mrb[0].mxu0 %v880
        %v1990 = vpop.f32.mrb[0].mxu0
        %v1991 = vadd.f32 0.0, %v1990
        %v1992 = vpop.f32.mrb[0].mxu0
        %1993 = vmatprep.mubr.f32.mxu0 0.0
        %1994 = vmatmul.mubr.f32.gmra.mrb[0].mxu0 %v882
        %v1995 = vpop.f32.mrb[0].mxu0
        %v1996 = vpop.f32.mrb[0].mxu0
        %1997 = vmatprep.mubr.f32.mxu0 0.0
        %1998 = vmatmul.mubr.f32.gmra.mrb[0].mxu0 %v884
        %v1999 = vpop.f32.mrb[0].mxu0
        %v2000 = vadd.f32 0.0, %v1999
        %v2001 = vpop.f32.mrb[0].mxu0
        %2002 = vmatprep.mubr.f32.mxu0 0.0
        %2003 = vmatmul.mubr.f32.gmra.mrb[0].mxu0 %v886
        %v2004 = vpop.f32.mrb[0].mxu0
        %v2005 = vpop.f32.mrb[0].mxu0
        %2006 = vmatprep.mubr.f32.mxu0 0.0
        %2007 = vmatmul.mubr.f32.gmra.mrb[0].mxu0 %v888
        %v2008 = vpop.f32.mrb[0].mxu0
        %v2009 = vadd.f32 0.0, %v2008
        %v2010 = vpop.f32.mrb[0].mxu0
        %2011 = vmatprep.mubr.f32.mxu0 0.0
        %2012 = vmatmul.mubr.f32.gmra.mrb[0].mxu0 %v890
        %v2013 = vpop.f32.mrb[0].mxu0
        %v2014 = vpop.f32.mrb[0].mxu0
        %2015 = vmatprep.mubr.f32.mxu0 0.0
        %2016 = vmatmul.mubr.f32.gmra.mrb[0].mxu0 %v892
        %v2017 = vpop.f32.mrb[0].mxu0
        %v2018 = vadd.f32 0.0, %v2017
        %v2019 = vpop.f32.mrb[0].mxu0
        %2020 = vmatprep.mubr.f32.mxu0 0.0
        %2021 = vmatmul.mubr.f32.gmra.mrb[0].mxu0 %v894
        %v2022 = vpop.f32.mrb[0].mxu0
        %v2023 = vpop.f32.mrb[0].mxu0
        %2024 = vmatprep.mubr.f32.mxu0 0.0
        %2025 = vmatmul.mubr.f32.gmra.mrb[0].mxu0 %v896
        %v2026 = vpop.f32.mrb[0].mxu0
        %v2027 = vadd.f32 0.0, %v2026
        %v2028 = vpop.f32.mrb[0].mxu0
        %2029 = vmatprep.mubr.f32.mxu0 0.0
        %2030 = vmatmul.mubr.f32.gmra.mrb[0].mxu0 %v898
        %v2031 = vpop.f32.mrb[0].mxu0
        %v2032 = vpop.f32.mrb[0].mxu0
        %2033 = vmatprep.mubr.f32.mxu0 0.0
        %2034 = vmatmul.mubr.f32.gmra.mrb[0].mxu0 %v1410
        %v2035 = vpop.f32.mrb[0].mxu0
        %v2036 = vadd.f32 0.0, %v2035
        %v2037 = vpop.f32.mrb[0].mxu0
        %2038 = vmatprep.mubr.f32.mxu0 0.0
        %2039 = vmatmul.mubr.f32.gmra.mrb[0].mxu0 %v1412
        %v2040 = vpop.f32.mrb[0].mxu0
        %v2041 = vpop.f32.mrb[0].mxu0
        %2042 = vmatprep.mubr.f32.mxu0 0.0
        %2043 = vmatmul.mubr.f32.gmra.mrb[0].mxu0 %v1910
        %v2044 = vpop.f32.mrb[0].mxu0
        %v2045 = vadd.f32 0.0, %v2044
        %v2046 = vpop.f32.mrb[0].mxu0
        %2047 = vmatprep.mubr.f32.mxu0 0.0
        %2048 = vmatmul.mubr.f32.gmra.mrb[0].mxu0 %v1912
        %v2049 = vpop.f32.mrb[0].mxu0
        %v2050 = vpop.f32.mrb[0].mxu0
        %2051 = vdwg.mxu0
        %v2052 = vadd.f32 %v1884, %v1982
        %v2053 = vadd.f32 %v1885, %v1991
        %v2054 = vadd.f32 %v1886, %v2000
        %v2055 = vadd.f32 %v1887, %v2009
        %v2056 = vadd.f32 %v1888, %v2018
        %v2057 = vadd.f32 %v1889, %v2027
        %v2058 = vadd.f32 %v1890, %v2036
        %v2059 = vadd.f32 %v1891, %v2045
        %v2061 = vlaneseq
        %v2062 = vshrl.u32 %v2061, 7
        %v2063 = vsub.s32 0, %v2062
        %v2064 = vrot.slane %v473, %v2063
        %v2066 = vadd.f32 %v2052, %v2064
        %v2067 = vadd.f32 %v2053, %v2064
        %v2068 = vadd.f32 %v2054, %v2064
        %v2069 = vadd.f32 %v2055, %v2064
        %v2070 = vadd.f32 %v2056, %v2064
        %v2071 = vadd.f32 %v2057, %v2064
        %v2072 = vadd.f32 %v2058, %v2064
        %v2073 = vadd.f32 %v2059, %v2064
        %v2074 = vmax.f32 %v2066, 0.0
        %v2075 = vmax.f32 %v2067, 0.0
        %v2076 = vmax.f32 %v2068, 0.0
        %v2077 = vmax.f32 %v2069, 0.0
        %v2078 = vmax.f32 %v2070, 0.0
        %v2079 = vmax.f32 %v2071, 0.0
        %v2080 = vmax.f32 %v2072, 0.0
        %v2081 = vmax.f32 %v2073, 0.0
        %2082 = vst [vmem:[%s256] sm:$0xff] %v2074
        %2083 = vst [vmem:[%s256 + $0x8] sm:$0xff] %v2075
        %2084 = vst [vmem:[%s256 + $0x10] sm:$0xff] %v2076
        %2085 = vst [vmem:[%s256 + $0x18] sm:$0xff] %v2077
        %2086 = vst [vmem:[%s256 + $0x20] sm:$0xff] %v2078
        %2087 = vst [vmem:[%s256 + $0x28] sm:$0xff] %v2079
        %2088 = vst [vmem:[%s256 + $0x30] sm:$0xff] %v2080
        %2089 = vst [vmem:[%s256 + $0x38] sm:$0xff] %v2081
        %s2090 = sand.u32 %s154, 1
        %s2091 = scalar_lea.sflag [#allocation5], %s2090
        %s2092 = sand.u32 %s154, 1
        %s2093 = smul.addr %s2092, 64
        %s2094 = scalar_lea.vmem [#allocation6], %s2093
        // Predicated region
        $region45: #{tpu_custom_call.1} parent=39 // pred_check
          %p2095 = pneg %p164
        $region46: #{tpu_custom_call.1} parent=39 // pred_check_branch
          %2097 = sbr.rel (%p2095) target = $region48
        $region47: #{tpu_custom_call.1} parent=39 // pred_region
          %s2099 = ssub.s32 1024, 1024
          %2100 = vsyncadd %s2091, %s2099
          %s2101 = smul.addr %s25, 8
          %s2102 = smul.addr %s24, 32
          %s2103 = sadd.s32 %s2101, %s2102
          %s2104 = smul.addr %s2103, 128
          %s2105 = scalar_lea.hbm %s5, %s2104
          %s2106 = sshll.u32 %s2094, 4
          %s2107 = int_to_ptr.vmem [resolvable:$true] %s2106
          %2112 = dma.vmem_to_hbm [thread:$0]  %s2107, 1024, %s2105, %s2091, 128, 128, 8
        $region48: #{tpu_custom_call.1} parent=39 // pred_fallthru
          _
      $region40: #{tpu_custom_call.1} parent=5 // pred_fallthru
        _
      %p2113 = scmp.le.s32.totalorder 2, %s15
      // Predicated region
      $region49: #{tpu_custom_call.1} parent=5 // pred_check
        %p2114 = pneg %p2113
      $region50: #{tpu_custom_call.1} parent=5 // pred_check_branch
        %2116 = sbr.rel (%p2114) target = $region52
      $region51: #{tpu_custom_call.1} parent=5 // pred_region
        %s2117 = ssub.s32 %s15, 2
        // Predicated region
        $region53: #{tpu_custom_call.1} parent=51 // pred_check
          %p2118 = pneg %p170
        $region54: #{tpu_custom_call.1} parent=51 // pred_check_branch
          %2120 = sbr.rel (%p2118) target = $region56
        $region55: #{tpu_custom_call.1} parent=51 // pred_region
          %s2121 = sand.u32 %s155, 1
          %s2122 = scalar_lea.sflag [#allocation5], %s2121
          %s2123 = sand.u32 %s155, 1
          %s2124 = smul.addr %s2123, 64
          %s2125 = scalar_lea.vmem [#allocation6], %s2124
          %2126 = dma.done %s2122, 1024
        $region56: #{tpu_custom_call.1} parent=51 // pred_fallthru
          _
      $region52: #{tpu_custom_call.1} parent=5 // pred_fallthru
        _
    $region6: #{tpu_custom_call.1} parent=1 // loop_footer
      %s19 = sadd.s32 1, %s15
    $region7: #{tpu_custom_call.1} parent=1 // loop_footer_branch
      %14 = sbr.rel target = $region3
    $region8: #{tpu_custom_call.1} parent=1 // loop_exit
      _
    %2127 = vsyncpa [#allocation4], 1
    %s2128 = scalar_lea.sflag [#allocation4], 1
    %2129 = vsyncpa %s2128, 1
    %2130 = vsyncpa [#allocation5], 1
    %s2131 = scalar_lea.sflag [#allocation5], 1
    %2132 = vsyncpa %s2131, 1

</llo_original>
